<compile_context>
chip_gen: v7x
topology: tpu7x:2x2x1
jax: 0.10.0
libtpu: 0.0.40
codegen_flags: <defaults>
</compile_context>

<pallas_src>
import functools

import jax
import jax.numpy as jnp
from jax import lax
from jax.experimental import pallas as pl
from jax.experimental.pallas import tpu as pltpu

NEG_INF = -1e9  # matches masked_fill_(mask, -1000000000.0)


def _mha_kernel(xq_ref, xkv_ref, mask_ref,
                wq_ref, bq_ref, wk_ref, bk_ref, wv_ref, bv_ref,
                wo_ref, bo_ref,
                out_ref,
                ctx_scr,
                *, num_heads, dim_q, dim_k):
    f32 = jnp.float32
    bf16 = jnp.bfloat16

    x_q = xq_ref[0]              # (Tq, D) bf16 -- query rows of this tile
    x_kv = xkv_ref[0]            # (S,  D) bf16 -- full sequence for K/V
    masked = mask_ref[0] != 0    # (Tq, S) bool; True == masked out

    for h in range(num_heads):   # static loop: all offsets / weight slabs static
        # Per-head projections. Head-major weights -> leading-axis slicing only.
        # The 1/sqrt(S) scale is already folded into wq/bq on the host.
        q_h = jnp.dot(x_q, wq_ref[h], preferred_element_type=f32) + bq_ref[h]
        k_h = jnp.dot(x_kv, wk_ref[h], preferred_element_type=f32) + bk_ref[h]
        v_h = jnp.dot(x_kv, wv_ref[h], preferred_element_type=f32) + bv_ref[h]

        # scores = q_h @ k_h^T : contract feature dims (no explicit transpose),
        # bf16 operands on the MXU, f32 accumulation.
        s = lax.dot_general(q_h.astype(bf16), k_h.astype(bf16),
                            (((1,), (1,)), ((), ())),
                            preferred_element_type=f32)          # (Tq, S)
        s = jnp.where(masked, NEG_INF, s)

        # Numerically-stable softmax; elementwise math in f32 (v5e has no bf16 VPU).
        s = s - jnp.max(s, axis=-1, keepdims=True)
        p = jnp.exp(s)
        p = p * pl.reciprocal(jnp.sum(p, axis=-1, keepdims=True), approx=True)

        ctx_h = jnp.dot(p.astype(bf16), v_h.astype(bf16),
                        preferred_element_type=f32)               # (Tq, dk)

        # Gather all heads into one (Tq, H*dk) scratch (static lane offsets),
        # so the output projection is a single deep matmul below.
        ctx_scr[:, h * dim_k:(h + 1) * dim_k] = ctx_h

    out = jnp.dot(ctx_scr[...].astype(bf16), wo_ref[...],
                  preferred_element_type=f32) + bo_ref[...]
    out_ref[0] = out.astype(out_ref.dtype)


def multi_head_attention(input_tensor, attention_mask,
                         wq, bq, wk, bk, wv, bv, wo, bo,
                         *, num_heads, dim_q, dim_k, q_tile=None):
    """input_tensor: (B, S, D); attention_mask: (B, S, S) bool (True == masked).
    Weights are the concatenation of the per-head nn.Linear weights (already
    transposed to (in, out)): wq (D, H*dq), wk/wv (D, H*dk), wo (H*dq, D).
    Returns (B, S, D) float32, matching the PyTorch module's forward."""
    B, S, D = input_tensor.shape
    assert dim_q == dim_k, "module requires dim_q == dim_k (concat feeds Linear(dim_q*H, D))"
    assert wq.shape == (D, num_heads * dim_q)
    assert wk.shape == (D, num_heads * dim_k)
    assert wv.shape == (D, num_heads * dim_k)
    assert wo.shape == (num_heads * dim_q, D)

    # Query-tile size: bounds per-step VMEM and gives the grid more parallel work.
    if q_tile is None:
        q_tile = 256
    tq = q_tile if (S % q_tile == 0) else S
    n_q = S // tq

    # Reference scales scores by query.size(1) ** 0.5 == sqrt(seq_len).
    inv_scale = 1.0 / (float(S) ** 0.5)

    bf16, f32 = jnp.bfloat16, jnp.float32

    x = input_tensor.astype(bf16)                 # bf16 activations
    mask_i8 = attention_mask.astype(jnp.int8)     # int8 mask (4x less DMA)

    def head_major(w, d):
        return w.reshape(D, num_heads, d).transpose(1, 0, 2)   # (H, D, d)

    # Fold the 1/sqrt(S) scale into the Q projection on the host (free).
    wq_h = (head_major(wq, dim_q) * inv_scale).astype(bf16)
    wk_h = head_major(wk, dim_k).astype(bf16)
    wv_h = head_major(wv, dim_k).astype(bf16)
    wo_b = wo.astype(bf16)

    bq_h = (bq.reshape(num_heads, 1, dim_q) * inv_scale).astype(f32)
    bk_h = bk.reshape(num_heads, 1, dim_k).astype(f32)
    bv_h = bv.reshape(num_heads, 1, dim_k).astype(f32)
    bo_2 = bo.reshape(1, D).astype(f32)

    kernel = functools.partial(_mha_kernel, num_heads=num_heads,
                               dim_q=dim_q, dim_k=dim_k)

    def resident(arr):
        # Constant block index -> block stays resident in VMEM across grid steps.
        zeros = (0,) * arr.ndim
        return pl.BlockSpec(arr.shape, lambda b, qi: zeros)

    out = pl.pallas_call(
        kernel,
        out_shape=jax.ShapeDtypeStruct((B, S, D), jnp.float32),
        grid_spec=pltpu.PrefetchScalarGridSpec(
            num_scalar_prefetch=0,
            grid=(B, n_q),
            in_specs=[
                pl.BlockSpec((1, tq, D), lambda b, qi: (b, qi, 0)),  # x (query tile)
                pl.BlockSpec((1, S, D), lambda b, qi: (b, 0, 0)),    # x (full seq for K/V)
                pl.BlockSpec((1, tq, S), lambda b, qi: (b, qi, 0)),  # mask (int8)
                resident(wq_h), resident(bq_h),
                resident(wk_h), resident(bk_h),
                resident(wv_h), resident(bv_h),
                resident(wo_b), resident(bo_2),
            ],
            out_specs=pl.BlockSpec((1, tq, D), lambda b, qi: (b, qi, 0)),
            scratch_shapes=[pltpu.VMEM((tq, num_heads * dim_k), jnp.float32)],
        ),
        compiler_params=pltpu.CompilerParams(
            dimension_semantics=("parallel", "parallel"),
            # Explicit scoped-VMEM budget (defaults: 16 MiB v5e / 32 MiB v6e,v7x);
            # 48 MiB leaves headroom under v7x's 64 MiB physical VMEM.
            vmem_limit_bytes=48 * 1024 * 1024,
        ),
    )(x, x, mask_i8,
      wq_h, bq_h, wk_h, bk_h, wv_h, bv_h, wo_b, bo_2)
    return out


def _reference(x, mask, wq, bq, wk, bk, wv, bv, wo, bo,
               *, num_heads, dim_q, dim_k):
    """Pure-JAX (f32) transcription of the PyTorch MultiHeadAttention forward."""
    B, S, D = x.shape
    q = jnp.einsum('bsd,de->bse', x, wq) + bq
    k = jnp.einsum('bsd,de->bse', x, wk) + bk
    v = jnp.einsum('bsd,de->bse', x, wv) + bv
    scale = float(S) ** 0.5                      # query.size(1) ** 0.5
    parts = []
    for h in range(num_heads):
        qh = q[..., h * dim_q:(h + 1) * dim_q]
        kh = k[..., h * dim_k:(h + 1) * dim_k]
        vh = v[..., h * dim_k:(h + 1) * dim_k]
        s = jnp.einsum('bqd,bkd->bqk', qh, kh) / scale
        s = jnp.where(mask, NEG_INF, s)
        p = jax.nn.softmax(s, axis=-1)
        parts.append(jnp.einsum('bqk,bkd->bqd', p, vh))
    ctx = jnp.concatenate(parts, axis=-1)        # (B, S, H*dk)
    return jnp.einsum('bse,ed->bsd', ctx, wo) + bo


if __name__ == "__main__":
    # Small deterministic setup: num_heads=4, dim_inp=32, dim_q=dim_k=16,
    # batch=2, seq=8.
    num_heads, dim_inp, dim_q = 4, 32, 16
    dim_k = dim_q
    B, S = 2, 8

    key = jax.random.PRNGKey(0)
    ks = jax.random.split(key, 10)

    def w(k, shape):
        return jax.random.normal(k, shape, jnp.float32) * 0.1

    wq = w(ks[0], (dim_inp, num_heads * dim_q))
    bq = w(ks[1], (num_heads * dim_q,))
    wk = w(ks[2], (dim_inp, num_heads * dim_k))
    bk = w(ks[3], (num_heads * dim_k,))
    wv = w(ks[4], (dim_inp, num_heads * dim_k))
    bv = w(ks[5], (num_heads * dim_k,))
    wo = w(ks[6], (num_heads * dim_q, dim_inp))
    bo = w(ks[7], (dim_inp,))

    x = jax.random.normal(ks[8], (B, S, dim_inp), jnp.float32)
    attention_mask = jax.random.bernoulli(ks[9], 0.25, (B, S, S))  # True == mask

    out = multi_head_attention(x, attention_mask,
                               wq, bq, wk, bk, wv, bv, wo, bo,
                               num_heads=num_heads, dim_q=dim_q, dim_k=dim_k)
    out = jax.block_until_ready(out)

    ref = _reference(x, attention_mask, wq, bq, wk, bk, wv, bv, wo, bo,
                     num_heads=num_heads, dim_q=dim_q, dim_k=dim_k)

    assert out.shape == (B, S, dim_inp)
    # bf16 MXU operands (f32 accumulation) => loosened tolerance vs the f32 reference.
    assert jnp.allclose(out, ref, atol=5e-2, rtol=5e-2), \
        float(jnp.max(jnp.abs(out - ref)))

    print("KERNEL_OK")
</pallas_src>

<mosaic_0001>
module attributes {stable_mosaic.version = 11 : i64} {
  func.func @_mha_kernel(%arg0: i32, %arg1: i32, %arg2: memref<1x8x32xbf16, #tpu.memory_space<vmem>>, %arg3: memref<1x8x32xbf16, #tpu.memory_space<vmem>>, %arg4: memref<1x8x8xi8, #tpu.memory_space<vmem>>, %arg5: memref<4x32x16xbf16, #tpu.memory_space<vmem>>, %arg6: memref<4x1x16xf32, #tpu.memory_space<vmem>>, %arg7: memref<4x32x16xbf16, #tpu.memory_space<vmem>>, %arg8: memref<4x1x16xf32, #tpu.memory_space<vmem>>, %arg9: memref<4x32x16xbf16, #tpu.memory_space<vmem>>, %arg10: memref<4x1x16xf32, #tpu.memory_space<vmem>>, %arg11: memref<64x32xbf16, #tpu.memory_space<vmem>>, %arg12: memref<1x32xf32, #tpu.memory_space<vmem>>, %arg13: memref<1x8x32xf32, #tpu.memory_space<vmem>>, %arg14: memref<8x64xf32, #tpu.memory_space<vmem>>) attributes {dimension_semantics = [#tpu.dimension_semantics<parallel>, #tpu.dimension_semantics<parallel>], iteration_bounds = array<i64: 2, 1>, scalar_prefetch = 0 : i64, scratch_operands = 1 : i64, tpu.core_type = #tpu.core_type<tc>, window_params = [{transform_indices = @transform_0, window_bounds = array<i64: 1, 8, 32>}, {transform_indices = @transform_1, window_bounds = array<i64: 1, 8, 32>}, {transform_indices = @transform_2, window_bounds = array<i64: 1, 8, 8>}, {pipeline_mode = #tpu.pipeline_mode<synchronous>, transform_indices = @transform_3, window_bounds = array<i64: 4, 32, 16>}, {pipeline_mode = #tpu.pipeline_mode<synchronous>, transform_indices = @transform_4, window_bounds = array<i64: 4, 1, 16>}, {pipeline_mode = #tpu.pipeline_mode<synchronous>, transform_indices = @transform_5, window_bounds = array<i64: 4, 32, 16>}, {pipeline_mode = #tpu.pipeline_mode<synchronous>, transform_indices = @transform_6, window_bounds = array<i64: 4, 1, 16>}, {pipeline_mode = #tpu.pipeline_mode<synchronous>, transform_indices = @transform_7, window_bounds = array<i64: 4, 32, 16>}, {pipeline_mode = #tpu.pipeline_mode<synchronous>, transform_indices = @transform_8, window_bounds = array<i64: 4, 1, 16>}, {pipeline_mode = #tpu.pipeline_mode<synchronous>, transform_indices = @transform_9, window_bounds = array<i64: 64, 32>}, {pipeline_mode = #tpu.pipeline_mode<synchronous>, transform_indices = @transform_10, window_bounds = array<i64: 1, 32>}, {transform_indices = @transform_11, window_bounds = array<i64: 1, 8, 32>}]} {
    %c0 = arith.constant 0 : index
    %c0_0 = arith.constant 0 : index
    %c0_1 = arith.constant 0 : index
    %0 = vector.load %arg2[%c0, %c0_0, %c0_1] : memref<1x8x32xbf16, #tpu.memory_space<vmem>>, vector<1x8x32xbf16>
    %1 = vector.shape_cast %0 : vector<1x8x32xbf16> to vector<8x32xbf16>
    %c0_2 = arith.constant 0 : index
    %c0_3 = arith.constant 0 : index
    %c0_4 = arith.constant 0 : index
    %2 = vector.load %arg3[%c0_2, %c0_3, %c0_4] : memref<1x8x32xbf16, #tpu.memory_space<vmem>>, vector<1x8x32xbf16>
    %3 = vector.shape_cast %2 : vector<1x8x32xbf16> to vector<8x32xbf16>
    %c0_5 = arith.constant 0 : index
    %c0_6 = arith.constant 0 : index
    %c0_7 = arith.constant 0 : index
    %4 = vector.load %arg4[%c0_5, %c0_6, %c0_7] : memref<1x8x8xi8, #tpu.memory_space<vmem>>, vector<1x8x8xi8>
    %5 = vector.shape_cast %4 : vector<1x8x8xi8> to vector<8x8xi8>
    %c0_i8 = arith.constant 0 : i8
    %6 = vector.broadcast %c0_i8 : i8 to vector<8x8xi8>
    %7 = arith.cmpi ne, %5, %6 : vector<8x8xi8>
    %c0_8 = arith.constant 0 : index
    %c0_9 = arith.constant 0 : index
    %c0_10 = arith.constant 0 : index
    %8 = vector.load %arg5[%c0_8, %c0_9, %c0_10] : memref<4x32x16xbf16, #tpu.memory_space<vmem>>, vector<1x32x16xbf16>
    %9 = vector.shape_cast %8 : vector<1x32x16xbf16> to vector<32x16xbf16>
    %cst = arith.constant dense<0.000000e+00> : vector<8x16xf32>
    %10 = tpu.matmul %1, %9, %cst {dimension_numbers = #tpu.dot_dimension_numbers<[1], [0], [0], [1], [0, 0, 1, 1], [], []>} : vector<8x32xbf16>, vector<32x16xbf16>, vector<8x16xf32> -> vector<8x16xf32>
    %c0_11 = arith.constant 0 : index
    %c0_12 = arith.constant 0 : index
    %c0_13 = arith.constant 0 : index
    %11 = vector.load %arg6[%c0_11, %c0_12, %c0_13] : memref<4x1x16xf32, #tpu.memory_space<vmem>>, vector<1x1x16xf32>
    %12 = vector.shape_cast %11 : vector<1x1x16xf32> to vector<1x16xf32>
    %13 = vector.broadcast %12 : vector<1x16xf32> to vector<8x16xf32>
    %14 = arith.addf %10, %13 : vector<8x16xf32>
    %c0_14 = arith.constant 0 : index
    %c0_15 = arith.constant 0 : index
    %c0_16 = arith.constant 0 : index
    %15 = vector.load %arg7[%c0_14, %c0_15, %c0_16] : memref<4x32x16xbf16, #tpu.memory_space<vmem>>, vector<1x32x16xbf16>
    %16 = vector.shape_cast %15 : vector<1x32x16xbf16> to vector<32x16xbf16>
    %cst_17 = arith.constant dense<0.000000e+00> : vector<8x16xf32>
    %17 = tpu.matmul %3, %16, %cst_17 {dimension_numbers = #tpu.dot_dimension_numbers<[1], [0], [0], [1], [0, 0, 1, 1], [], []>} : vector<8x32xbf16>, vector<32x16xbf16>, vector<8x16xf32> -> vector<8x16xf32>
    %c0_18 = arith.constant 0 : index
    %c0_19 = arith.constant 0 : index
    %c0_20 = arith.constant 0 : index
    %18 = vector.load %arg8[%c0_18, %c0_19, %c0_20] : memref<4x1x16xf32, #tpu.memory_space<vmem>>, vector<1x1x16xf32>
    %19 = vector.shape_cast %18 : vector<1x1x16xf32> to vector<1x16xf32>
    %20 = vector.broadcast %19 : vector<1x16xf32> to vector<8x16xf32>
    %21 = arith.addf %17, %20 : vector<8x16xf32>
    %c0_21 = arith.constant 0 : index
    %c0_22 = arith.constant 0 : index
    %c0_23 = arith.constant 0 : index
    %22 = vector.load %arg9[%c0_21, %c0_22, %c0_23] : memref<4x32x16xbf16, #tpu.memory_space<vmem>>, vector<1x32x16xbf16>
    %23 = vector.shape_cast %22 : vector<1x32x16xbf16> to vector<32x16xbf16>
    %cst_24 = arith.constant dense<0.000000e+00> : vector<8x16xf32>
    %24 = tpu.matmul %3, %23, %cst_24 {dimension_numbers = #tpu.dot_dimension_numbers<[1], [0], [0], [1], [0, 0, 1, 1], [], []>} : vector<8x32xbf16>, vector<32x16xbf16>, vector<8x16xf32> -> vector<8x16xf32>
    %c0_25 = arith.constant 0 : index
    %c0_26 = arith.constant 0 : index
    %c0_27 = arith.constant 0 : index
    %25 = vector.load %arg10[%c0_25, %c0_26, %c0_27] : memref<4x1x16xf32, #tpu.memory_space<vmem>>, vector<1x1x16xf32>
    %26 = vector.shape_cast %25 : vector<1x1x16xf32> to vector<1x16xf32>
    %27 = vector.broadcast %26 : vector<1x16xf32> to vector<8x16xf32>
    %28 = arith.addf %24, %27 : vector<8x16xf32>
    %29 = arith.truncf %14 : vector<8x16xf32> to vector<8x16xbf16>
    %30 = arith.truncf %21 : vector<8x16xf32> to vector<8x16xbf16>
    %cst_28 = arith.constant dense<0.000000e+00> : vector<8x8xf32>
    %31 = tpu.matmul %29, %30, %cst_28 {dimension_numbers = #tpu.dot_dimension_numbers<[1], [1], [0], [0], [0, 0, 1, 0], [], []>} : vector<8x16xbf16>, vector<8x16xbf16>, vector<8x8xf32> -> vector<8x8xf32>
    %cst_29 = arith.constant -1.000000e+09 : f32
    %32 = vector.broadcast %cst_29 : f32 to vector<8x8xf32>
    %33 = arith.select %7, %32, %31 : vector<8x8xi1>, vector<8x8xf32>
    %cst_30 = arith.constant dense<0xFF800000> : vector<8xf32>
    %34 = vector.multi_reduction <maximumf>, %33, %cst_30 [1] : vector<8x8xf32> to vector<8xf32>
    %35 = vector.shape_cast %34 : vector<8xf32> to vector<8x1xf32>
    %36 = vector.broadcast %35 : vector<8x1xf32> to vector<8x8xf32>
    %37 = arith.subf %33, %36 : vector<8x8xf32>
    %38 = math.exp %37 : vector<8x8xf32>
    %cst_31 = arith.constant dense<0.000000e+00> : vector<8xf32>
    %39 = vector.multi_reduction <add>, %38, %cst_31 [1] : vector<8x8xf32> to vector<8xf32>
    %40 = vector.shape_cast %39 : vector<8xf32> to vector<8x1xf32>
    %41 = tpu.reciprocal %40 {approx = true} : vector<8x1xf32> -> vector<8x1xf32>
    %42 = vector.broadcast %41 : vector<8x1xf32> to vector<8x8xf32>
    %43 = arith.mulf %38, %42 : vector<8x8xf32>
    %44 = arith.truncf %43 : vector<8x8xf32> to vector<8x8xbf16>
    %45 = arith.truncf %28 : vector<8x16xf32> to vector<8x16xbf16>
    %cst_32 = arith.constant dense<0.000000e+00> : vector<8x16xf32>
    %46 = tpu.matmul %44, %45, %cst_32 {dimension_numbers = #tpu.dot_dimension_numbers<[1], [0], [0], [1], [0, 0, 1, 1], [], []>} : vector<8x8xbf16>, vector<8x16xbf16>, vector<8x16xf32> -> vector<8x16xf32>
    %c0_33 = arith.constant 0 : index
    %c0_34 = arith.constant 0 : index
    %47 = vector.load %arg14[%c0_33, %c0_34] : memref<8x64xf32, #tpu.memory_space<vmem>>, vector<8x16xf32>
    tpu.vector_store %arg14[%c0_33, %c0_34], %46 {strides = array<i32>} : memref<8x64xf32, #tpu.memory_space<vmem>>, vector<8x16xf32>,
    %c1 = arith.constant 1 : index
    %c0_35 = arith.constant 0 : index
    %c0_36 = arith.constant 0 : index
    %48 = vector.load %arg5[%c1, %c0_35, %c0_36] : memref<4x32x16xbf16, #tpu.memory_space<vmem>>, vector<1x32x16xbf16>
    %49 = vector.shape_cast %48 : vector<1x32x16xbf16> to vector<32x16xbf16>
    %cst_37 = arith.constant dense<0.000000e+00> : vector<8x16xf32>
    %50 = tpu.matmul %1, %49, %cst_37 {dimension_numbers = #tpu.dot_dimension_numbers<[1], [0], [0], [1], [0, 0, 1, 1], [], []>} : vector<8x32xbf16>, vector<32x16xbf16>, vector<8x16xf32> -> vector<8x16xf32>
    %c1_38 = arith.constant 1 : index
    %c0_39 = arith.constant 0 : index
    %c0_40 = arith.constant 0 : index
    %51 = vector.load %arg6[%c1_38, %c0_39, %c0_40] : memref<4x1x16xf32, #tpu.memory_space<vmem>>, vector<1x1x16xf32>
    %52 = vector.shape_cast %51 : vector<1x1x16xf32> to vector<1x16xf32>
    %53 = vector.broadcast %52 : vector<1x16xf32> to vector<8x16xf32>
    %54 = arith.addf %50, %53 : vector<8x16xf32>
    %c1_41 = arith.constant 1 : index
    %c0_42 = arith.constant 0 : index
    %c0_43 = arith.constant 0 : index
    %55 = vector.load %arg7[%c1_41, %c0_42, %c0_43] : memref<4x32x16xbf16, #tpu.memory_space<vmem>>, vector<1x32x16xbf16>
    %56 = vector.shape_cast %55 : vector<1x32x16xbf16> to vector<32x16xbf16>
    %cst_44 = arith.constant dense<0.000000e+00> : vector<8x16xf32>
    %57 = tpu.matmul %3, %56, %cst_44 {dimension_numbers = #tpu.dot_dimension_numbers<[1], [0], [0], [1], [0, 0, 1, 1], [], []>} : vector<8x32xbf16>, vector<32x16xbf16>, vector<8x16xf32> -> vector<8x16xf32>
    %c1_45 = arith.constant 1 : index
    %c0_46 = arith.constant 0 : index
    %c0_47 = arith.constant 0 : index
    %58 = vector.load %arg8[%c1_45, %c0_46, %c0_47] : memref<4x1x16xf32, #tpu.memory_space<vmem>>, vector<1x1x16xf32>
    %59 = vector.shape_cast %58 : vector<1x1x16xf32> to vector<1x16xf32>
    %60 = vector.broadcast %59 : vector<1x16xf32> to vector<8x16xf32>
    %61 = arith.addf %57, %60 : vector<8x16xf32>
    %c1_48 = arith.constant 1 : index
    %c0_49 = arith.constant 0 : index
    %c0_50 = arith.constant 0 : index
    %62 = vector.load %arg9[%c1_48, %c0_49, %c0_50] : memref<4x32x16xbf16, #tpu.memory_space<vmem>>, vector<1x32x16xbf16>
    %63 = vector.shape_cast %62 : vector<1x32x16xbf16> to vector<32x16xbf16>
    %cst_51 = arith.constant dense<0.000000e+00> : vector<8x16xf32>
    %64 = tpu.matmul %3, %63, %cst_51 {dimension_numbers = #tpu.dot_dimension_numbers<[1], [0], [0], [1], [0, 0, 1, 1], [], []>} : vector<8x32xbf16>, vector<32x16xbf16>, vector<8x16xf32> -> vector<8x16xf32>
    %c1_52 = arith.constant 1 : index
    %c0_53 = arith.constant 0 : index
    %c0_54 = arith.constant 0 : index
    %65 = vector.load %arg10[%c1_52, %c0_53, %c0_54] : memref<4x1x16xf32, #tpu.memory_space<vmem>>, vector<1x1x16xf32>
    %66 = vector.shape_cast %65 : vector<1x1x16xf32> to vector<1x16xf32>
    %67 = vector.broadcast %66 : vector<1x16xf32> to vector<8x16xf32>
    %68 = arith.addf %64, %67 : vector<8x16xf32>
    %69 = arith.truncf %54 : vector<8x16xf32> to vector<8x16xbf16>
    %70 = arith.truncf %61 : vector<8x16xf32> to vector<8x16xbf16>
    %cst_55 = arith.constant dense<0.000000e+00> : vector<8x8xf32>
    %71 = tpu.matmul %69, %70, %cst_55 {dimension_numbers = #tpu.dot_dimension_numbers<[1], [1], [0], [0], [0, 0, 1, 0], [], []>} : vector<8x16xbf16>, vector<8x16xbf16>, vector<8x8xf32> -> vector<8x8xf32>
    %cst_56 = arith.constant -1.000000e+09 : f32
    %72 = vector.broadcast %cst_56 : f32 to vector<8x8xf32>
    %73 = arith.select %7, %72, %71 : vector<8x8xi1>, vector<8x8xf32>
    %cst_57 = arith.constant dense<0xFF800000> : vector<8xf32>
    %74 = vector.multi_reduction <maximumf>, %73, %cst_57 [1] : vector<8x8xf32> to vector<8xf32>
    %75 = vector.shape_cast %74 : vector<8xf32> to vector<8x1xf32>
    %76 = vector.broadcast %75 : vector<8x1xf32> to vector<8x8xf32>
    %77 = arith.subf %73, %76 : vector<8x8xf32>
    %78 = math.exp %77 : vector<8x8xf32>
    %cst_58 = arith.constant dense<0.000000e+00> : vector<8xf32>
    %79 = vector.multi_reduction <add>, %78, %cst_58 [1] : vector<8x8xf32> to vector<8xf32>
    %80 = vector.shape_cast %79 : vector<8xf32> to vector<8x1xf32>
    %81 = tpu.reciprocal %80 {approx = true} : vector<8x1xf32> -> vector<8x1xf32>
    %82 = vector.broadcast %81 : vector<8x1xf32> to vector<8x8xf32>
    %83 = arith.mulf %78, %82 : vector<8x8xf32>
    %84 = arith.truncf %83 : vector<8x8xf32> to vector<8x8xbf16>
    %85 = arith.truncf %68 : vector<8x16xf32> to vector<8x16xbf16>
    %cst_59 = arith.constant dense<0.000000e+00> : vector<8x16xf32>
    %86 = tpu.matmul %84, %85, %cst_59 {dimension_numbers = #tpu.dot_dimension_numbers<[1], [0], [0], [1], [0, 0, 1, 1], [], []>} : vector<8x8xbf16>, vector<8x16xbf16>, vector<8x16xf32> -> vector<8x16xf32>
    %c0_60 = arith.constant 0 : index
    %c16 = arith.constant 16 : index
    %87 = vector.load %arg14[%c0_60, %c16] : memref<8x64xf32, #tpu.memory_space<vmem>>, vector<8x16xf32>
    tpu.vector_store %arg14[%c0_60, %c16], %86 {strides = array<i32>} : memref<8x64xf32, #tpu.memory_space<vmem>>, vector<8x16xf32>,
    %c2 = arith.constant 2 : index
    %c0_61 = arith.constant 0 : index
    %c0_62 = arith.constant 0 : index
    %88 = vector.load %arg5[%c2, %c0_61, %c0_62] : memref<4x32x16xbf16, #tpu.memory_space<vmem>>, vector<1x32x16xbf16>
    %89 = vector.shape_cast %88 : vector<1x32x16xbf16> to vector<32x16xbf16>
    %cst_63 = arith.constant dense<0.000000e+00> : vector<8x16xf32>
    %90 = tpu.matmul %1, %89, %cst_63 {dimension_numbers = #tpu.dot_dimension_numbers<[1], [0], [0], [1], [0, 0, 1, 1], [], []>} : vector<8x32xbf16>, vector<32x16xbf16>, vector<8x16xf32> -> vector<8x16xf32>
    %c2_64 = arith.constant 2 : index
    %c0_65 = arith.constant 0 : index
    %c0_66 = arith.constant 0 : index
    %91 = vector.load %arg6[%c2_64, %c0_65, %c0_66] : memref<4x1x16xf32, #tpu.memory_space<vmem>>, vector<1x1x16xf32>
    %92 = vector.shape_cast %91 : vector<1x1x16xf32> to vector<1x16xf32>
    %93 = vector.broadcast %92 : vector<1x16xf32> to vector<8x16xf32>
    %94 = arith.addf %90, %93 : vector<8x16xf32>
    %c2_67 = arith.constant 2 : index
    %c0_68 = arith.constant 0 : index
    %c0_69 = arith.constant 0 : index
    %95 = vector.load %arg7[%c2_67, %c0_68, %c0_69] : memref<4x32x16xbf16, #tpu.memory_space<vmem>>, vector<1x32x16xbf16>
    %96 = vector.shape_cast %95 : vector<1x32x16xbf16> to vector<32x16xbf16>
    %cst_70 = arith.constant dense<0.000000e+00> : vector<8x16xf32>
    %97 = tpu.matmul %3, %96, %cst_70 {dimension_numbers = #tpu.dot_dimension_numbers<[1], [0], [0], [1], [0, 0, 1, 1], [], []>} : vector<8x32xbf16>, vector<32x16xbf16>, vector<8x16xf32> -> vector<8x16xf32>
    %c2_71 = arith.constant 2 : index
    %c0_72 = arith.constant 0 : index
    %c0_73 = arith.constant 0 : index
    %98 = vector.load %arg8[%c2_71, %c0_72, %c0_73] : memref<4x1x16xf32, #tpu.memory_space<vmem>>, vector<1x1x16xf32>
    %99 = vector.shape_cast %98 : vector<1x1x16xf32> to vector<1x16xf32>
    %100 = vector.broadcast %99 : vector<1x16xf32> to vector<8x16xf32>
    %101 = arith.addf %97, %100 : vector<8x16xf32>
    %c2_74 = arith.constant 2 : index
    %c0_75 = arith.constant 0 : index
    %c0_76 = arith.constant 0 : index
    %102 = vector.load %arg9[%c2_74, %c0_75, %c0_76] : memref<4x32x16xbf16, #tpu.memory_space<vmem>>, vector<1x32x16xbf16>
    %103 = vector.shape_cast %102 : vector<1x32x16xbf16> to vector<32x16xbf16>
    %cst_77 = arith.constant dense<0.000000e+00> : vector<8x16xf32>
    %104 = tpu.matmul %3, %103, %cst_77 {dimension_numbers = #tpu.dot_dimension_numbers<[1], [0], [0], [1], [0, 0, 1, 1], [], []>} : vector<8x32xbf16>, vector<32x16xbf16>, vector<8x16xf32> -> vector<8x16xf32>
    %c2_78 = arith.constant 2 : index
    %c0_79 = arith.constant 0 : index
    %c0_80 = arith.constant 0 : index
    %105 = vector.load %arg10[%c2_78, %c0_79, %c0_80] : memref<4x1x16xf32, #tpu.memory_space<vmem>>, vector<1x1x16xf32>
    %106 = vector.shape_cast %105 : vector<1x1x16xf32> to vector<1x16xf32>
    %107 = vector.broadcast %106 : vector<1x16xf32> to vector<8x16xf32>
    %108 = arith.addf %104, %107 : vector<8x16xf32>
    %109 = arith.truncf %94 : vector<8x16xf32> to vector<8x16xbf16>
    %110 = arith.truncf %101 : vector<8x16xf32> to vector<8x16xbf16>
    %cst_81 = arith.constant dense<0.000000e+00> : vector<8x8xf32>
    %111 = tpu.matmul %109, %110, %cst_81 {dimension_numbers = #tpu.dot_dimension_numbers<[1], [1], [0], [0], [0, 0, 1, 0], [], []>} : vector<8x16xbf16>, vector<8x16xbf16>, vector<8x8xf32> -> vector<8x8xf32>
    %cst_82 = arith.constant -1.000000e+09 : f32
    %112 = vector.broadcast %cst_82 : f32 to vector<8x8xf32>
    %113 = arith.select %7, %112, %111 : vector<8x8xi1>, vector<8x8xf32>
    %cst_83 = arith.constant dense<0xFF800000> : vector<8xf32>
    %114 = vector.multi_reduction <maximumf>, %113, %cst_83 [1] : vector<8x8xf32> to vector<8xf32>
    %115 = vector.shape_cast %114 : vector<8xf32> to vector<8x1xf32>
    %116 = vector.broadcast %115 : vector<8x1xf32> to vector<8x8xf32>
    %117 = arith.subf %113, %116 : vector<8x8xf32>
    %118 = math.exp %117 : vector<8x8xf32>
    %cst_84 = arith.constant dense<0.000000e+00> : vector<8xf32>
    %119 = vector.multi_reduction <add>, %118, %cst_84 [1] : vector<8x8xf32> to vector<8xf32>
    %120 = vector.shape_cast %119 : vector<8xf32> to vector<8x1xf32>
    %121 = tpu.reciprocal %120 {approx = true} : vector<8x1xf32> -> vector<8x1xf32>
    %122 = vector.broadcast %121 : vector<8x1xf32> to vector<8x8xf32>
    %123 = arith.mulf %118, %122 : vector<8x8xf32>
    %124 = arith.truncf %123 : vector<8x8xf32> to vector<8x8xbf16>
    %125 = arith.truncf %108 : vector<8x16xf32> to vector<8x16xbf16>
    %cst_85 = arith.constant dense<0.000000e+00> : vector<8x16xf32>
    %126 = tpu.matmul %124, %125, %cst_85 {dimension_numbers = #tpu.dot_dimension_numbers<[1], [0], [0], [1], [0, 0, 1, 1], [], []>} : vector<8x8xbf16>, vector<8x16xbf16>, vector<8x16xf32> -> vector<8x16xf32>
    %c0_86 = arith.constant 0 : index
    %c32 = arith.constant 32 : index
    %127 = vector.load %arg14[%c0_86, %c32] : memref<8x64xf32, #tpu.memory_space<vmem>>, vector<8x16xf32>
    tpu.vector_store %arg14[%c0_86, %c32], %126 {strides = array<i32>} : memref<8x64xf32, #tpu.memory_space<vmem>>, vector<8x16xf32>,
    %c3 = arith.constant 3 : index
    %c0_87 = arith.constant 0 : index
    %c0_88 = arith.constant 0 : index
    %128 = vector.load %arg5[%c3, %c0_87, %c0_88] : memref<4x32x16xbf16, #tpu.memory_space<vmem>>, vector<1x32x16xbf16>
    %129 = vector.shape_cast %128 : vector<1x32x16xbf16> to vector<32x16xbf16>
    %cst_89 = arith.constant dense<0.000000e+00> : vector<8x16xf32>
    %130 = tpu.matmul %1, %129, %cst_89 {dimension_numbers = #tpu.dot_dimension_numbers<[1], [0], [0], [1], [0, 0, 1, 1], [], []>} : vector<8x32xbf16>, vector<32x16xbf16>, vector<8x16xf32> -> vector<8x16xf32>
    %c3_90 = arith.constant 3 : index
    %c0_91 = arith.constant 0 : index
    %c0_92 = arith.constant 0 : index
    %131 = vector.load %arg6[%c3_90, %c0_91, %c0_92] : memref<4x1x16xf32, #tpu.memory_space<vmem>>, vector<1x1x16xf32>
    %132 = vector.shape_cast %131 : vector<1x1x16xf32> to vector<1x16xf32>
    %133 = vector.broadcast %132 : vector<1x16xf32> to vector<8x16xf32>
    %134 = arith.addf %130, %133 : vector<8x16xf32>
    %c3_93 = arith.constant 3 : index
    %c0_94 = arith.constant 0 : index
    %c0_95 = arith.constant 0 : index
    %135 = vector.load %arg7[%c3_93, %c0_94, %c0_95] : memref<4x32x16xbf16, #tpu.memory_space<vmem>>, vector<1x32x16xbf16>
    %136 = vector.shape_cast %135 : vector<1x32x16xbf16> to vector<32x16xbf16>
    %cst_96 = arith.constant dense<0.000000e+00> : vector<8x16xf32>
    %137 = tpu.matmul %3, %136, %cst_96 {dimension_numbers = #tpu.dot_dimension_numbers<[1], [0], [0], [1], [0, 0, 1, 1], [], []>} : vector<8x32xbf16>, vector<32x16xbf16>, vector<8x16xf32> -> vector<8x16xf32>
    %c3_97 = arith.constant 3 : index
    %c0_98 = arith.constant 0 : index
    %c0_99 = arith.constant 0 : index
    %138 = vector.load %arg8[%c3_97, %c0_98, %c0_99] : memref<4x1x16xf32, #tpu.memory_space<vmem>>, vector<1x1x16xf32>
    %139 = vector.shape_cast %138 : vector<1x1x16xf32> to vector<1x16xf32>
    %140 = vector.broadcast %139 : vector<1x16xf32> to vector<8x16xf32>
    %141 = arith.addf %137, %140 : vector<8x16xf32>
    %c3_100 = arith.constant 3 : index
    %c0_101 = arith.constant 0 : index
    %c0_102 = arith.constant 0 : index
    %142 = vector.load %arg9[%c3_100, %c0_101, %c0_102] : memref<4x32x16xbf16, #tpu.memory_space<vmem>>, vector<1x32x16xbf16>
    %143 = vector.shape_cast %142 : vector<1x32x16xbf16> to vector<32x16xbf16>
    %cst_103 = arith.constant dense<0.000000e+00> : vector<8x16xf32>
    %144 = tpu.matmul %3, %143, %cst_103 {dimension_numbers = #tpu.dot_dimension_numbers<[1], [0], [0], [1], [0, 0, 1, 1], [], []>} : vector<8x32xbf16>, vector<32x16xbf16>, vector<8x16xf32> -> vector<8x16xf32>
    %c3_104 = arith.constant 3 : index
    %c0_105 = arith.constant 0 : index
    %c0_106 = arith.constant 0 : index
    %145 = vector.load %arg10[%c3_104, %c0_105, %c0_106] : memref<4x1x16xf32, #tpu.memory_space<vmem>>, vector<1x1x16xf32>
    %146 = vector.shape_cast %145 : vector<1x1x16xf32> to vector<1x16xf32>
    %147 = vector.broadcast %146 : vector<1x16xf32> to vector<8x16xf32>
    %148 = arith.addf %144, %147 : vector<8x16xf32>
    %149 = arith.truncf %134 : vector<8x16xf32> to vector<8x16xbf16>
    %150 = arith.truncf %141 : vector<8x16xf32> to vector<8x16xbf16>
    %cst_107 = arith.constant dense<0.000000e+00> : vector<8x8xf32>
    %151 = tpu.matmul %149, %150, %cst_107 {dimension_numbers = #tpu.dot_dimension_numbers<[1], [1], [0], [0], [0, 0, 1, 0], [], []>} : vector<8x16xbf16>, vector<8x16xbf16>, vector<8x8xf32> -> vector<8x8xf32>
    %cst_108 = arith.constant -1.000000e+09 : f32
    %152 = vector.broadcast %cst_108 : f32 to vector<8x8xf32>
    %153 = arith.select %7, %152, %151 : vector<8x8xi1>, vector<8x8xf32>
    %cst_109 = arith.constant dense<0xFF800000> : vector<8xf32>
    %154 = vector.multi_reduction <maximumf>, %153, %cst_109 [1] : vector<8x8xf32> to vector<8xf32>
    %155 = vector.shape_cast %154 : vector<8xf32> to vector<8x1xf32>
    %156 = vector.broadcast %155 : vector<8x1xf32> to vector<8x8xf32>
    %157 = arith.subf %153, %156 : vector<8x8xf32>
    %158 = math.exp %157 : vector<8x8xf32>
    %cst_110 = arith.constant dense<0.000000e+00> : vector<8xf32>
    %159 = vector.multi_reduction <add>, %158, %cst_110 [1] : vector<8x8xf32> to vector<8xf32>
    %160 = vector.shape_cast %159 : vector<8xf32> to vector<8x1xf32>
    %161 = tpu.reciprocal %160 {approx = true} : vector<8x1xf32> -> vector<8x1xf32>
    %162 = vector.broadcast %161 : vector<8x1xf32> to vector<8x8xf32>
    %163 = arith.mulf %158, %162 : vector<8x8xf32>
    %164 = arith.truncf %163 : vector<8x8xf32> to vector<8x8xbf16>
    %165 = arith.truncf %148 : vector<8x16xf32> to vector<8x16xbf16>
    %cst_111 = arith.constant dense<0.000000e+00> : vector<8x16xf32>
    %166 = tpu.matmul %164, %165, %cst_111 {dimension_numbers = #tpu.dot_dimension_numbers<[1], [0], [0], [1], [0, 0, 1, 1], [], []>} : vector<8x8xbf16>, vector<8x16xbf16>, vector<8x16xf32> -> vector<8x16xf32>
    %c0_112 = arith.constant 0 : index
    %c48 = arith.constant 48 : index
    %167 = vector.load %arg14[%c0_112, %c48] : memref<8x64xf32, #tpu.memory_space<vmem>>, vector<8x16xf32>
    tpu.vector_store %arg14[%c0_112, %c48], %166 {strides = array<i32>} : memref<8x64xf32, #tpu.memory_space<vmem>>, vector<8x16xf32>,
    %c0_113 = arith.constant 0 : index
    %c0_114 = arith.constant 0 : index
    %168 = vector.load %arg14[%c0_113, %c0_114] : memref<8x64xf32, #tpu.memory_space<vmem>>, vector<8x64xf32>
    %169 = arith.truncf %168 : vector<8x64xf32> to vector<8x64xbf16>
    %c0_115 = arith.constant 0 : index
    %c0_116 = arith.constant 0 : index
    %170 = vector.load %arg11[%c0_115, %c0_116] : memref<64x32xbf16, #tpu.memory_space<vmem>>, vector<64x32xbf16>
    %cst_117 = arith.constant dense<0.000000e+00> : vector<8x32xf32>
    %171 = tpu.matmul %169, %170, %cst_117 {dimension_numbers = #tpu.dot_dimension_numbers<[1], [0], [0], [1], [0, 0, 1, 1], [], []>} : vector<8x64xbf16>, vector<64x32xbf16>, vector<8x32xf32> -> vector<8x32xf32>
    %c0_118 = arith.constant 0 : index
    %c0_119 = arith.constant 0 : index
    %172 = vector.load %arg12[%c0_118, %c0_119] : memref<1x32xf32, #tpu.memory_space<vmem>>, vector<1x32xf32>
    %173 = vector.broadcast %172 : vector<1x32xf32> to vector<8x32xf32>
    %174 = arith.addf %171, %173 : vector<8x32xf32>
    %c0_120 = arith.constant 0 : index
    %c0_121 = arith.constant 0 : index
    %c0_122 = arith.constant 0 : index
    %175 = vector.load %arg13[%c0_120, %c0_121, %c0_122] : memref<1x8x32xf32, #tpu.memory_space<vmem>>, vector<1x8x32xf32>
    %176 = vector.shape_cast %175 : vector<1x8x32xf32> to vector<8x32xf32>
    %177 = vector.shape_cast %174 : vector<8x32xf32> to vector<1x8x32xf32>
    tpu.vector_store %arg13[%c0_120, %c0_121, %c0_122], %177 {strides = array<i32>} : memref<1x8x32xf32, #tpu.memory_space<vmem>>, vector<1x8x32xf32>,
    return
  }
  func.func @transform_0(%arg0: i32, %arg1: i32) -> (i32, i32, i32) {
    %c0_i32 = arith.constant 0 : i32
    %c0_i32_0 = arith.constant 0 : i32
    return %arg0, %arg1, %c0_i32 : i32, i32, i32
  }
  func.func @transform_1(%arg0: i32, %arg1: i32) -> (i32, i32, i32) {
    %c0_i32 = arith.constant 0 : i32
    %c0_i32_0 = arith.constant 0 : i32
    %c0_i32_1 = arith.constant 0 : i32
    return %arg0, %c0_i32, %c0_i32_0 : i32, i32, i32
  }
  func.func @transform_2(%arg0: i32, %arg1: i32) -> (i32, i32, i32) {
    %c0_i32 = arith.constant 0 : i32
    %c0_i32_0 = arith.constant 0 : i32
    return %arg0, %arg1, %c0_i32 : i32, i32, i32
  }
  func.func @transform_3(%arg0: i32, %arg1: i32) -> (i32, i32, i32) {
    %c0_i32 = arith.constant 0 : i32
    %c0_i32_0 = arith.constant 0 : i32
    %c0_i32_1 = arith.constant 0 : i32
    %c0_i32_2 = arith.constant 0 : i32
    return %c0_i32, %c0_i32_0, %c0_i32_1 : i32, i32, i32
  }
  func.func @transform_4(%arg0: i32, %arg1: i32) -> (i32, i32, i32) {
    %c0_i32 = arith.constant 0 : i32
    %c0_i32_0 = arith.constant 0 : i32
    %c0_i32_1 = arith.constant 0 : i32
    %c0_i32_2 = arith.constant 0 : i32
    return %c0_i32, %c0_i32_0, %c0_i32_1 : i32, i32, i32
  }
  func.func @transform_5(%arg0: i32, %arg1: i32) -> (i32, i32, i32) {
    %c0_i32 = arith.constant 0 : i32
    %c0_i32_0 = arith.constant 0 : i32
    %c0_i32_1 = arith.constant 0 : i32
    %c0_i32_2 = arith.constant 0 : i32
    return %c0_i32, %c0_i32_0, %c0_i32_1 : i32, i32, i32
  }
  func.func @transform_6(%arg0: i32, %arg1: i32) -> (i32, i32, i32) {
    %c0_i32 = arith.constant 0 : i32
    %c0_i32_0 = arith.constant 0 : i32
    %c0_i32_1 = arith.constant 0 : i32
    %c0_i32_2 = arith.constant 0 : i32
    return %c0_i32, %c0_i32_0, %c0_i32_1 : i32, i32, i32
  }
  func.func @transform_7(%arg0: i32, %arg1: i32) -> (i32, i32, i32) {
    %c0_i32 = arith.constant 0 : i32
    %c0_i32_0 = arith.constant 0 : i32
    %c0_i32_1 = arith.constant 0 : i32
    %c0_i32_2 = arith.constant 0 : i32
    return %c0_i32, %c0_i32_0, %c0_i32_1 : i32, i32, i32
  }
  func.func @transform_8(%arg0: i32, %arg1: i32) -> (i32, i32, i32) {
    %c0_i32 = arith.constant 0 : i32
    %c0_i32_0 = arith.constant 0 : i32
    %c0_i32_1 = arith.constant 0 : i32
    %c0_i32_2 = arith.constant 0 : i32
    return %c0_i32, %c0_i32_0, %c0_i32_1 : i32, i32, i32
  }
  func.func @transform_9(%arg0: i32, %arg1: i32) -> (i32, i32) {
    %c0_i32 = arith.constant 0 : i32
    %c0_i32_0 = arith.constant 0 : i32
    %c0_i32_1 = arith.constant 0 : i32
    return %c0_i32, %c0_i32_0 : i32, i32
  }
  func.func @transform_10(%arg0: i32, %arg1: i32) -> (i32, i32) {
    %c0_i32 = arith.constant 0 : i32
    %c0_i32_0 = arith.constant 0 : i32
    %c0_i32_1 = arith.constant 0 : i32
    return %c0_i32, %c0_i32_0 : i32, i32
  }
  func.func @transform_11(%arg0: i32, %arg1: i32) -> (i32, i32, i32) {
    %c0_i32 = arith.constant 0 : i32
    %c0_i32_0 = arith.constant 0 : i32
    return %arg0, %arg1, %c0_i32 : i32, i32, i32
  }
}

</mosaic_0001>

<llo_original>
// kernel: tpu_custom_call.1
$region0: #{tpu_custom_call.1}
  #allocation0 [shape = 'u32[]', space=smem, size = 0x4, offset = 0x4, fixed_abs, tag = 'smem constant byte address 0x4 - core index']
  #allocation1 [shape = 'u32[144,128]{1,0:T(1,128)}', space=vmem, size = 0x12000, scoped, tag = 'internal scratch']
  #allocation2 [shape = 'f32[8,64]{1,0:T(8,128)}', space=vmem, size = 0x1000, scoped, tag = 'scratch operand']
  %s0 = inlined_call_operand.vmem [shape: bf16[2,8,32], index: 0, kind: input, shape index: {}]
  %s1 = inlined_call_operand.vmem [shape: bf16[2,8,32], index: 1, kind: input, shape index: {}]
  %s2 = inlined_call_operand.vmem [shape: s8[2,8,8], index: 2, kind: input, shape index: {}]
  %s3 = inlined_call_operand.vmem [shape: bf16[4,32,16], index: 3, kind: input, shape index: {}]
  %s4 = inlined_call_operand.vmem [shape: f32[4,1,16], index: 4, kind: input, shape index: {}]
  %s5 = inlined_call_operand.vmem [shape: bf16[4,32,16], index: 5, kind: input, shape index: {}]
  %s6 = inlined_call_operand.vmem [shape: f32[4,1,16], index: 6, kind: input, shape index: {}]
  %s7 = inlined_call_operand.vmem [shape: bf16[4,32,16], index: 7, kind: input, shape index: {}]
  %s8 = inlined_call_operand.vmem [shape: f32[4,1,16], index: 8, kind: input, shape index: {}]
  %s9 = inlined_call_operand.vmem [shape: bf16[64,32], index: 9, kind: input, shape index: {}]
  %s10 = inlined_call_operand.vmem [shape: f32[1,32], index: 10, kind: input, shape index: {}]
  %s11 = inlined_call_operand.hbm [shape: f32[2,8,32], index: 11, kind: output, shape index: {}]
  %s12 = sld [smem:[#allocation0]]
  $region77: #{tpu_custom_call.1} parent=0
    _
  %s14 = ssub.s32 1, %s12
  %s15 = scalar_select 0, %s14, %s12
  $region1: #{tpu_custom_call.1} parent=0
    #allocation3 [shape = 'u8[8192]{0}', space=vmem, size = 0x2000, scoped, tag = 'output window, operand 0']
    #allocation4 [shape = 's32[2]{0}', space=sflag, size = 0x8, scoped, tag = 'scoped memory for tpu_custom_call.1']
    %16 = vsyncpa [#allocation4], 0
    %s17 = scalar_lea.sflag [#allocation4], 1
    %18 = vsyncpa %s17, 0
    loop: start=0, step=1, limit=4
    $region2: #{tpu_custom_call.1} parent=1 // loop_pre_header
      _
    $region3: #{tpu_custom_call.1} parent=1 // loop_header
      %s20 = sphi 0, %s24
      %p21 = scmp.ge.s32.totalorder %s20, 4
      %s27 = sphi 0, %s39
      %s28 = sphi 0, %s35
      %s29 = sphi 0, %s27
      %s30 = sphi 0, %s28
      %s31 = sphi 0, %s29
      %s32 = sphi 0, %s30
      %s44 = sphi 0, %s46
      %s47 = sphi 0, %s44
      %s48 = sphi 0, %s47
      %s64 = sphi 0, %s48
      %s70 = sphi 0, %s72
      %s73 = sphi 0, %s70
      %s74 = sphi 0, %s73
      %s90 = sphi 0, %s74
      %s98 = sphi 0, %s100
      %s101 = sphi 0, %s98
      %s102 = sphi 0, %s101
      %s118 = sphi 0, %s102
      %s122 = sphi 0, %s122
      %s124 = sphi 0, %s122
      %s125 = sphi 0, %s124
      %s139 = sphi 0, %s125
      %s143 = sphi 0, %s143
      %s145 = sphi 0, %s143
      %s146 = sphi 0, %s145
      %s160 = sphi 0, %s146
      %s164 = sphi 0, %s164
      %s166 = sphi 0, %s164
      %s167 = sphi 0, %s166
      %s181 = sphi 0, %s167
      %s185 = sphi 0, %s185
      %s187 = sphi 0, %s185
      %s188 = sphi 0, %s187
      %s202 = sphi 0, %s188
      %s206 = sphi 0, %s206
      %s208 = sphi 0, %s206
      %s209 = sphi 0, %s208
      %s223 = sphi 0, %s209
      %s227 = sphi 0, %s227
      %s229 = sphi 0, %s227
      %s230 = sphi 0, %s229
      %s244 = sphi 0, %s230
      %s248 = sphi 0, %s248
      %s250 = sphi 0, %s248
      %s251 = sphi 0, %s250
      %s265 = sphi 0, %s251
      %s269 = sphi 0, %s269
      %s271 = sphi 0, %s269
      %s272 = sphi 0, %s271
      %s286 = sphi 0, %s272
      %s294 = sphi 0, %s296
      %s297 = sphi 0, %s294
      %s298 = sphi 0, %s297
      %s314 = sphi 0, %s298
    $region4: #{tpu_custom_call.1} parent=1 // loop_header_branch
      %23 = sbr.rel (%p21) target = $region8
    $region5: #{tpu_custom_call.1} parent=1 // loop_body
      %s25 = ssub.s32 %s20, 1
      %s26 = ssub.s32 %s20, 2
      %s33 = sadd.s32 1, %s28
      %p34 = scmp.ge.s32.totalorder %s33, 1
      %s35 = scalar_select %p34, 0, %s33
      %s36 = sadd.s32 1, %s27
      %s37 = scalar_select %p34, %s36, %s27
      %p38 = scmp.ge.s32.totalorder %s37, 2
      %s39 = scalar_select %p38, 0, %s37
      %s40 = ssub.s32 %s27, %s39
      %s41 = ssub.s32 %s28, %s35
      %s42 = sor.u32 %s40, %s41
      %p43 = scmp.eq.s32.totalorder %s42, 0
      %s45 = sadd.s32 %s44, 1
      %s46 = scalar_select %p43, %s44, %s45
      %p49 = pneg %p43
      %p50 = scmp.eq.s32.totalorder %s20, 1
      %p51 = por %p49, %p50
      %p52 = scmp.ne.s32.totalorder %s44, %s47
      %p53 = scmp.eq.s32.totalorder %s20, 0
      %p54 = por %p52, %p53
      %p55 = scmp.ne.s32.totalorder %s44, %s47
      %p56 = scmp.eq.s32.totalorder %s25, 1
      %p57 = por %p55, %p56
      %p58 = scmp.ne.s32.totalorder %s47, %s48
      %p59 = scmp.eq.s32.totalorder %s25, 0
      %p60 = por %p58, %p59
      %p61 = scmp.ne.s32.totalorder %s47, %s48
      %p62 = scmp.eq.s32.totalorder %s26, 1
      %p63 = por %p61, %p62
      %p65 = scmp.ne.s32.totalorder %s48, %s64
      %p66 = scmp.eq.s32.totalorder %s26, 0
      %p67 = por %p65, %p66
      %s68 = ssub.s32 %s27, %s39
      %p69 = scmp.eq.s32.totalorder %s68, 0
      %s71 = sadd.s32 %s70, 1
      %s72 = scalar_select %p69, %s70, %s71
      %p75 = pneg %p69
      %p76 = scmp.eq.s32.totalorder %s20, 1
      %p77 = por %p75, %p76
      %p78 = scmp.ne.s32.totalorder %s70, %s73
      %p79 = scmp.eq.s32.totalorder %s20, 0
      %p80 = por %p78, %p79
      %p81 = scmp.ne.s32.totalorder %s70, %s73
      %p82 = scmp.eq.s32.totalorder %s25, 1
      %p83 = por %p81, %p82
      %p84 = scmp.ne.s32.totalorder %s73, %s74
      %p85 = scmp.eq.s32.totalorder %s25, 0
      %p86 = por %p84, %p85
      %p87 = scmp.ne.s32.totalorder %s73, %s74
      %p88 = scmp.eq.s32.totalorder %s26, 1
      %p89 = por %p87, %p88
      %p91 = scmp.ne.s32.totalorder %s74, %s90
      %p92 = scmp.eq.s32.totalorder %s26, 0
      %p93 = por %p91, %p92
      %s94 = ssub.s32 %s27, %s39
      %s95 = ssub.s32 %s28, %s35
      %s96 = sor.u32 %s94, %s95
      %p97 = scmp.eq.s32.totalorder %s96, 0
      %s99 = sadd.s32 %s98, 1
      %s100 = scalar_select %p97, %s98, %s99
      %p103 = pneg %p97
      %p104 = scmp.eq.s32.totalorder %s20, 1
      %p105 = por %p103, %p104
      %p106 = scmp.ne.s32.totalorder %s98, %s101
      %p107 = scmp.eq.s32.totalorder %s20, 0
      %p108 = por %p106, %p107
      %p109 = scmp.ne.s32.totalorder %s98, %s101
      %p110 = scmp.eq.s32.totalorder %s25, 1
      %p111 = por %p109, %p110
      %p112 = scmp.ne.s32.totalorder %s101, %s102
      %p113 = scmp.eq.s32.totalorder %s25, 0
      %p114 = por %p112, %p113
      %p115 = scmp.ne.s32.totalorder %s101, %s102
      %p116 = scmp.eq.s32.totalorder %s26, 1
      %p117 = por %p115, %p116
      %p119 = scmp.ne.s32.totalorder %s102, %s118
      %p120 = scmp.eq.s32.totalorder %s26, 0
      %p121 = por %p119, %p120
      %s123 = sadd.s32 %s122, 1
      %p126 = scmp.eq.s32.totalorder %s20, 1
      %p127 = scmp.ne.s32.totalorder %s122, %s124
      %p128 = scmp.eq.s32.totalorder %s20, 0
      %p129 = por %p127, %p128
      %p130 = scmp.ne.s32.totalorder %s122, %s124
      %p131 = scmp.eq.s32.totalorder %s25, 1
      %p132 = por %p130, %p131
      %p133 = scmp.ne.s32.totalorder %s124, %s125
      %p134 = scmp.eq.s32.totalorder %s25, 0
      %p135 = por %p133, %p134
      %p136 = scmp.ne.s32.totalorder %s124, %s125
      %p137 = scmp.eq.s32.totalorder %s26, 1
      %p138 = por %p136, %p137
      %p140 = scmp.ne.s32.totalorder %s125, %s139
      %p141 = scmp.eq.s32.totalorder %s26, 0
      %p142 = por %p140, %p141
      %s144 = sadd.s32 %s143, 1
      %p147 = scmp.eq.s32.totalorder %s20, 1
      %p148 = scmp.ne.s32.totalorder %s143, %s145
      %p149 = scmp.eq.s32.totalorder %s20, 0
      %p150 = por %p148, %p149
      %p151 = scmp.ne.s32.totalorder %s143, %s145
      %p152 = scmp.eq.s32.totalorder %s25, 1
      %p153 = por %p151, %p152
      %p154 = scmp.ne.s32.totalorder %s145, %s146
      %p155 = scmp.eq.s32.totalorder %s25, 0
      %p156 = por %p154, %p155
      %p157 = scmp.ne.s32.totalorder %s145, %s146
      %p158 = scmp.eq.s32.totalorder %s26, 1
      %p159 = por %p157, %p158
      %p161 = scmp.ne.s32.totalorder %s146, %s160
      %p162 = scmp.eq.s32.totalorder %s26, 0
      %p163 = por %p161, %p162
      %s165 = sadd.s32 %s164, 1
      %p168 = scmp.eq.s32.totalorder %s20, 1
      %p169 = scmp.ne.s32.totalorder %s164, %s166
      %p170 = scmp.eq.s32.totalorder %s20, 0
      %p171 = por %p169, %p170
      %p172 = scmp.ne.s32.totalorder %s164, %s166
      %p173 = scmp.eq.s32.totalorder %s25, 1
      %p174 = por %p172, %p173
      %p175 = scmp.ne.s32.totalorder %s166, %s167
      %p176 = scmp.eq.s32.totalorder %s25, 0
      %p177 = por %p175, %p176
      %p178 = scmp.ne.s32.totalorder %s166, %s167
      %p179 = scmp.eq.s32.totalorder %s26, 1
      %p180 = por %p178, %p179
      %p182 = scmp.ne.s32.totalorder %s167, %s181
      %p183 = scmp.eq.s32.totalorder %s26, 0
      %p184 = por %p182, %p183
      %s186 = sadd.s32 %s185, 1
      %p189 = scmp.eq.s32.totalorder %s20, 1
      %p190 = scmp.ne.s32.totalorder %s185, %s187
      %p191 = scmp.eq.s32.totalorder %s20, 0
      %p192 = por %p190, %p191
      %p193 = scmp.ne.s32.totalorder %s185, %s187
      %p194 = scmp.eq.s32.totalorder %s25, 1
      %p195 = por %p193, %p194
      %p196 = scmp.ne.s32.totalorder %s187, %s188
      %p197 = scmp.eq.s32.totalorder %s25, 0
      %p198 = por %p196, %p197
      %p199 = scmp.ne.s32.totalorder %s187, %s188
      %p200 = scmp.eq.s32.totalorder %s26, 1
      %p201 = por %p199, %p200
      %p203 = scmp.ne.s32.totalorder %s188, %s202
      %p204 = scmp.eq.s32.totalorder %s26, 0
      %p205 = por %p203, %p204
      %s207 = sadd.s32 %s206, 1
      %p210 = scmp.eq.s32.totalorder %s20, 1
      %p211 = scmp.ne.s32.totalorder %s206, %s208
      %p212 = scmp.eq.s32.totalorder %s20, 0
      %p213 = por %p211, %p212
      %p214 = scmp.ne.s32.totalorder %s206, %s208
      %p215 = scmp.eq.s32.totalorder %s25, 1
      %p216 = por %p214, %p215
      %p217 = scmp.ne.s32.totalorder %s208, %s209
      %p218 = scmp.eq.s32.totalorder %s25, 0
      %p219 = por %p217, %p218
      %p220 = scmp.ne.s32.totalorder %s208, %s209
      %p221 = scmp.eq.s32.totalorder %s26, 1
      %p222 = por %p220, %p221
      %p224 = scmp.ne.s32.totalorder %s209, %s223
      %p225 = scmp.eq.s32.totalorder %s26, 0
      %p226 = por %p224, %p225
      %s228 = sadd.s32 %s227, 1
      %p231 = scmp.eq.s32.totalorder %s20, 1
      %p232 = scmp.ne.s32.totalorder %s227, %s229
      %p233 = scmp.eq.s32.totalorder %s20, 0
      %p234 = por %p232, %p233
      %p235 = scmp.ne.s32.totalorder %s227, %s229
      %p236 = scmp.eq.s32.totalorder %s25, 1
      %p237 = por %p235, %p236
      %p238 = scmp.ne.s32.totalorder %s229, %s230
      %p239 = scmp.eq.s32.totalorder %s25, 0
      %p240 = por %p238, %p239
      %p241 = scmp.ne.s32.totalorder %s229, %s230
      %p242 = scmp.eq.s32.totalorder %s26, 1
      %p243 = por %p241, %p242
      %p245 = scmp.ne.s32.totalorder %s230, %s244
      %p246 = scmp.eq.s32.totalorder %s26, 0
      %p247 = por %p245, %p246
      %s249 = sadd.s32 %s248, 1
      %p252 = scmp.eq.s32.totalorder %s20, 1
      %p253 = scmp.ne.s32.totalorder %s248, %s250
      %p254 = scmp.eq.s32.totalorder %s20, 0
      %p255 = por %p253, %p254
      %p256 = scmp.ne.s32.totalorder %s248, %s250
      %p257 = scmp.eq.s32.totalorder %s25, 1
      %p258 = por %p256, %p257
      %p259 = scmp.ne.s32.totalorder %s250, %s251
      %p260 = scmp.eq.s32.totalorder %s25, 0
      %p261 = por %p259, %p260
      %p262 = scmp.ne.s32.totalorder %s250, %s251
      %p263 = scmp.eq.s32.totalorder %s26, 1
      %p264 = por %p262, %p263
      %p266 = scmp.ne.s32.totalorder %s251, %s265
      %p267 = scmp.eq.s32.totalorder %s26, 0
      %p268 = por %p266, %p267
      %s270 = sadd.s32 %s269, 1
      %p273 = scmp.eq.s32.totalorder %s20, 1
      %p274 = scmp.ne.s32.totalorder %s269, %s271
      %p275 = scmp.eq.s32.totalorder %s20, 0
      %p276 = por %p274, %p275
      %p277 = scmp.ne.s32.totalorder %s269, %s271
      %p278 = scmp.eq.s32.totalorder %s25, 1
      %p279 = por %p277, %p278
      %p280 = scmp.ne.s32.totalorder %s271, %s272
      %p281 = scmp.eq.s32.totalorder %s25, 0
      %p282 = por %p280, %p281
      %p283 = scmp.ne.s32.totalorder %s271, %s272
      %p284 = scmp.eq.s32.totalorder %s26, 1
      %p285 = por %p283, %p284
      %p287 = scmp.ne.s32.totalorder %s272, %s286
      %p288 = scmp.eq.s32.totalorder %s26, 0
      %p289 = por %p287, %p288
      %s290 = ssub.s32 %s27, %s39
      %s291 = ssub.s32 %s28, %s35
      %s292 = sor.u32 %s290, %s291
      %p293 = scmp.eq.s32.totalorder %s292, 0
      %s295 = sadd.s32 %s294, 1
      %s296 = scalar_select %p293, %s294, %s295
      %p299 = pneg %p293
      %p300 = scmp.eq.s32.totalorder %s20, 1
      %p301 = por %p299, %p300
      %p302 = scmp.ne.s32.totalorder %s294, %s297
      %p303 = scmp.eq.s32.totalorder %s20, 0
      %p304 = por %p302, %p303
      %p305 = scmp.ne.s32.totalorder %s294, %s297
      %p306 = scmp.eq.s32.totalorder %s25, 1
      %p307 = por %p305, %p306
      %p308 = scmp.ne.s32.totalorder %s297, %s298
      %p309 = scmp.eq.s32.totalorder %s25, 0
      %p310 = por %p308, %p309
      %p311 = scmp.ne.s32.totalorder %s297, %s298
      %p312 = scmp.eq.s32.totalorder %s26, 1
      %p313 = por %p311, %p312
      %p315 = scmp.ne.s32.totalorder %s298, %s314
      %p316 = scmp.eq.s32.totalorder %s26, 0
      %p317 = por %p315, %p316
      %p318 = scmp.le.s32.totalorder 1, %s20
      %p319 = scmp.lt.s32.totalorder %s20, 3
      %p320 = pnand %p318, %p319
      %p321 = pneg %p320
      // Predicated region
      $region9: #{tpu_custom_call.1} parent=5 // pred_check
        _
      $region10: #{tpu_custom_call.1} parent=5 // pred_check_branch
        %323 = sbr.rel (%p320) target = $region12
      $region11: #{tpu_custom_call.1} parent=5 // pred_region
        %s324 = ssub.s32 %s20, 1
        // Predicated region
        $region13: #{tpu_custom_call.1} parent=11 // pred_check
          %p325 = pneg %p135
        $region14: #{tpu_custom_call.1} parent=11 // pred_check_branch
          %327 = sbr.rel (%p325) target = $region16
        $region15: #{tpu_custom_call.1} parent=11 // pred_region
          _
        $region16: #{tpu_custom_call.1} parent=11 // pred_fallthru
          _
        // Predicated region
        $region17: #{tpu_custom_call.1} parent=11 // pred_check
          %p328 = pneg %p156
        $region18: #{tpu_custom_call.1} parent=11 // pred_check_branch
          %330 = sbr.rel (%p328) target = $region20
        $region19: #{tpu_custom_call.1} parent=11 // pred_region
          _
        $region20: #{tpu_custom_call.1} parent=11 // pred_fallthru
          _
        // Predicated region
        $region21: #{tpu_custom_call.1} parent=11 // pred_check
          %p331 = pneg %p177
        $region22: #{tpu_custom_call.1} parent=11 // pred_check_branch
          %333 = sbr.rel (%p331) target = $region24
        $region23: #{tpu_custom_call.1} parent=11 // pred_region
          _
        $region24: #{tpu_custom_call.1} parent=11 // pred_fallthru
          _
        // Predicated region
        $region25: #{tpu_custom_call.1} parent=11 // pred_check
          %p334 = pneg %p198
        $region26: #{tpu_custom_call.1} parent=11 // pred_check_branch
          %336 = sbr.rel (%p334) target = $region28
        $region27: #{tpu_custom_call.1} parent=11 // pred_region
          _
        $region28: #{tpu_custom_call.1} parent=11 // pred_fallthru
          _
        // Predicated region
        $region29: #{tpu_custom_call.1} parent=11 // pred_check
          %p337 = pneg %p219
        $region30: #{tpu_custom_call.1} parent=11 // pred_check_branch
          %339 = sbr.rel (%p337) target = $region32
        $region31: #{tpu_custom_call.1} parent=11 // pred_region
          _
        $region32: #{tpu_custom_call.1} parent=11 // pred_fallthru
          _
        // Predicated region
        $region33: #{tpu_custom_call.1} parent=11 // pred_check
          %p340 = pneg %p240
        $region34: #{tpu_custom_call.1} parent=11 // pred_check_branch
          %342 = sbr.rel (%p340) target = $region36
        $region35: #{tpu_custom_call.1} parent=11 // pred_region
          _
        $region36: #{tpu_custom_call.1} parent=11 // pred_fallthru
          _
        // Predicated region
        $region37: #{tpu_custom_call.1} parent=11 // pred_check
          %p343 = pneg %p261
        $region38: #{tpu_custom_call.1} parent=11 // pred_check_branch
          %345 = sbr.rel (%p343) target = $region40
        $region39: #{tpu_custom_call.1} parent=11 // pred_region
          _
        $region40: #{tpu_custom_call.1} parent=11 // pred_fallthru
          _
        // Predicated region
        $region41: #{tpu_custom_call.1} parent=11 // pred_check
          %p346 = pneg %p282
        $region42: #{tpu_custom_call.1} parent=11 // pred_check_branch
          %348 = sbr.rel (%p346) target = $region44
        $region43: #{tpu_custom_call.1} parent=11 // pred_region
          _
        $region44: #{tpu_custom_call.1} parent=11 // pred_fallthru
          _
      $region12: #{tpu_custom_call.1} parent=5 // pred_fallthru
        _
      %p349 = scmp.lt.s32.totalorder %s20, 2
      // Predicated region
      $region45: #{tpu_custom_call.1} parent=5 // pred_check
        %p350 = pneg %p349
      $region46: #{tpu_custom_call.1} parent=5 // pred_check_branch
        %352 = sbr.rel (%p350) target = $region48
      $region47: #{tpu_custom_call.1} parent=5 // pred_region
        // Predicated region
        $region49: #{tpu_custom_call.1} parent=47 // pred_check
          %p353 = pneg %p54
        $region50: #{tpu_custom_call.1} parent=47 // pred_check_branch
          %355 = sbr.rel (%p353) target = $region52
        $region51: #{tpu_custom_call.1} parent=47 // pred_region
          %p356 = scmp.lt.s32.totalorder %s27, 1
          %s357 = scalar_select %p356, %s27, 1
          %p358 = scmp.lt.s32.totalorder %s28, 0
          %s359 = scalar_select %p358, %s28, 0
          %s360 = sadd.s32 %s359, %s357
          %s361 = smul.addr %s360, 4
          %s362 = scalar_lea.vmem %s0, %s361
        $region52: #{tpu_custom_call.1} parent=47 // pred_fallthru
          _
        // Predicated region
        $region53: #{tpu_custom_call.1} parent=47 // pred_check
          %p363 = pneg %p80
        $region54: #{tpu_custom_call.1} parent=47 // pred_check_branch
          %365 = sbr.rel (%p363) target = $region56
        $region55: #{tpu_custom_call.1} parent=47 // pred_region
          %p366 = scmp.lt.s32.totalorder %s27, 1
          %s367 = scalar_select %p366, %s27, 1
          %s368 = smul.addr %s367, 4
          %s369 = scalar_lea.vmem %s1, %s368
        $region56: #{tpu_custom_call.1} parent=47 // pred_fallthru
          _
        // Predicated region
        $region57: #{tpu_custom_call.1} parent=47 // pred_check
          %p370 = pneg %p108
        $region58: #{tpu_custom_call.1} parent=47 // pred_check_branch
          %372 = sbr.rel (%p370) target = $region60
        $region59: #{tpu_custom_call.1} parent=47 // pred_region
          %p373 = scmp.lt.s32.totalorder %s27, 1
          %s374 = scalar_select %p373, %s27, 1
          %p375 = scmp.lt.s32.totalorder %s28, 0
          %s376 = scalar_select %p375, %s28, 0
          %s377 = sadd.s32 %s376, %s374
          %s378 = smul.addr %s377, 2
          %s379 = scalar_lea.vmem %s2, %s378
        $region60: #{tpu_custom_call.1} parent=47 // pred_fallthru
          _
      $region48: #{tpu_custom_call.1} parent=5 // pred_fallthru
        _
      %p380 = scmp.le.s32.totalorder 1, %s20
      %p381 = scmp.lt.s32.totalorder %s20, 3
      %p382 = pnand %p380, %p381
      %p383 = pneg %p382
      // Predicated region
      $region61: #{tpu_custom_call.1} parent=5 // pred_check
        _
      $region62: #{tpu_custom_call.1} parent=5 // pred_check_branch
        %385 = sbr.rel (%p382) target = $region64
      $region63: #{tpu_custom_call.1} parent=5 // pred_region
        %s386 = ssub.s32 %s20, 1
        %p387 = scmp.lt.s32.totalorder %s29, 1
        %s388 = scalar_select %p387, %s29, 1
        %p389 = scmp.lt.s32.totalorder %s30, 0
        %s390 = scalar_select %p389, %s30, 0
        %s391 = sadd.s32 %s390, %s388
        %s392 = smul.addr %s391, 4
        %s393 = scalar_lea.vmem %s0, %s392
        %p394 = pneg %p60
        %p395 = pneg %p57
        %p396 = scmp.lt.s32.totalorder %s29, 1
        %s397 = scalar_select %p396, %s29, 1
        %s398 = smul.addr %s397, 4
        %s399 = scalar_lea.vmem %s1, %s398
        %p400 = pneg %p86
        %p401 = pneg %p83
        %p402 = scmp.lt.s32.totalorder %s29, 1
        %s403 = scalar_select %p402, %s29, 1
        %p404 = scmp.lt.s32.totalorder %s30, 0
        %s405 = scalar_select %p404, %s30, 0
        %s406 = sadd.s32 %s405, %s403
        %s407 = smul.addr %s406, 2
        %s408 = scalar_lea.vmem %s2, %s407
        %p409 = pneg %p114
        %p410 = pneg %p111
        %p411 = pneg %p135
        %p412 = pneg %p132
        %p413 = pneg %p156
        %p414 = pneg %p153
        %p415 = pneg %p177
        %p416 = pneg %p174
        %p417 = pneg %p198
        %p418 = pneg %p195
        %p419 = pneg %p219
        %p420 = pneg %p216
        %p421 = pneg %p240
        %p422 = pneg %p237
        %p423 = pneg %p261
        %p424 = pneg %p258
        %p425 = pneg %p282
        %p426 = pneg %p279
        %p427 = pneg %p310
        %p428 = pneg %p307
        %s429 = sand.u32 %s297, 1
        %s430 = scalar_lea.sflag [#allocation4], %s429
        %s431 = sand.u32 %s297, 1
        %s432 = smul.addr %s431, 8
        %s433 = scalar_lea.vmem [#allocation3], %s432
        %p434 = scmp.lt.s32.totalorder %s29, 1
        %s435 = scalar_select %p434, %s29, 1
        %p436 = scmp.lt.s32.totalorder %s30, 0
        %s437 = scalar_select %p436, %s30, 0
        %s438 = sadd.s32 %s437, %s435
        %s439 = smul.addr %s438, 4
        %s440 = scalar_lea.vmem %s0, %s439
        %p441 = scmp.lt.s32.totalorder %s29, 1
        %s442 = scalar_select %p441, %s29, 1
        %s443 = smul.addr %s442, 4
        %s444 = scalar_lea.vmem %s1, %s443
        %p445 = scmp.lt.s32.totalorder %s29, 1
        %s446 = scalar_select %p445, %s29, 1
        %p447 = scmp.lt.s32.totalorder %s30, 0
        %s448 = scalar_select %p447, %s30, 0
        %s449 = sadd.s32 %s448, %s446
        %s450 = smul.addr %s449, 2
        %s451 = scalar_lea.vmem %s2, %s450
        %v455 = vld [vmem:[%s440] sm:$0xf]
        %v456 = vld [vmem:[%s444] sm:$0xf]
        %v457 = vld [vmem:[%s451] sm:$0x3]
        %vm458 = vnez %v457
        %v459 = vld [vmem:[%s3] sm:$0xf]
        %v460 = vld [vmem:[%s3 + $0x4] sm:$0xf]
        %v461 = vld [vmem:[%s3 + $0x8] sm:$0xf]
        %v462 = vld [vmem:[%s3 + $0xc] sm:$0xf]
        %v463 = vld [vmem:[%s4] sm:$0x1]
        %v465 = vlaneseq
        %v466 = vshrl.u32 %v465, 7
        %v467 = vsub.s32 0, %v466
        %v468 = vrot.slane %v463, %v467
        %v474 = vunpack.c.l.b16 %v459
        %v475 = vunpack.c.l.b16 %v460
        %v476 = vunpack.c.l.b16 %v461
        %v477 = vunpack.c.l.b16 %v462
        %v478 = vpack.c.b16 %v475, %v474
        %v479 = vpack.c.b16 %v477, %v476
        %vm482 = vcmask 261120
        %v484 = vsel %vm482, %v455, 0
        %486 = vmatprep.subr.bf16.mxu0 0
        %487 = vmatpush1.bf16.msra.mxu0 %v478
        %488 = vmatprep.subr.bf16.mxu0 0
        %489 = vmatpush1.bf16.msra.mxu0 %v479
        %490 = vmatprep.subr.bf16.mxu0 0
        %491 = vmatpush1.bf16.msra.mxu0 0
        %492 = vmatprep.subr.bf16.mxu0 0
        %493 = vmatpush1.bf16.msra.mxu0 0
        %494 = vmatprep.subr.bf16.mxu0 0
        %495 = vmatpush1.bf16.msra.mxu0 0
        %496 = vmatprep.subr.bf16.mxu0 0
        %497 = vmatpush1.bf16.msra.mxu0 0
        %498 = vmatprep.subr.bf16.mxu0 0
        %499 = vmatpush1.bf16.msra.mxu0 0
        %500 = vmatprep.subr.bf16.mxu0 0
        %501 = vmatpush1.bf16.msra.mxu0 0
        %502 = vmatprep.subr.bf16.mxu0 0
        %503 = vmatpush1.bf16.msra.mxu0 0
        %504 = vmatprep.subr.bf16.mxu0 0
        %505 = vmatpush1.bf16.msra.mxu0 0
        %506 = vmatprep.subr.bf16.mxu0 0
        %507 = vmatpush1.bf16.msra.mxu0 0
        %508 = vmatprep.subr.bf16.mxu0 0
        %509 = vmatpush1.bf16.msra.mxu0 0
        %510 = vmatprep.subr.bf16.mxu0 0
        %511 = vmatpush1.bf16.msra.mxu0 0
        %512 = vmatprep.subr.bf16.mxu0 0
        %513 = vmatpush1.bf16.msra.mxu0 0
        %514 = vmatprep.subr.bf16.mxu0 0
        %515 = vmatpush1.bf16.msra.mxu0 0
        %516 = vmatprep.subr.bf16.mxu0 0
        %517 = vmatpush1.bf16.msra.mxu0 0
        %518 = vmatprep.mubr.bf16.mxu0 0
        %519 = vmatmul.mubr.bf16.gmra.mrb[0].mxu0 %v484
        %v520 = vpop.f32.mrb[0].mxu0
        %v521 = vadd.f32 %v468, %v520
        %v522 = vpop.f32.mrb[0].mxu0
        %v523 = vpop.f32.mrb[0].mxu0
        %v524 = vpop.f32.mrb[0].mxu0
        %525 = vdwg.mxu0
        %v526 = vld [vmem:[%s5] sm:$0xf]
        %v527 = vld [vmem:[%s5 + $0x4] sm:$0xf]
        %v528 = vld [vmem:[%s5 + $0x8] sm:$0xf]
        %v529 = vld [vmem:[%s5 + $0xc] sm:$0xf]
        %v530 = vld [vmem:[%s6] sm:$0x1]
        %v532 = vlaneseq
        %v533 = vshrl.u32 %v532, 7
        %v534 = vsub.s32 0, %v533
        %v535 = vrot.slane %v530, %v534
        %v541 = vunpack.c.l.b16 %v526
        %v542 = vunpack.c.l.b16 %v527
        %v543 = vunpack.c.l.b16 %v528
        %v544 = vunpack.c.l.b16 %v529
        %v545 = vpack.c.b16 %v542, %v541
        %v546 = vpack.c.b16 %v544, %v543
        %v550 = vsel %vm482, %v456, 0
        %552 = vmatprep.subr.bf16.mxu0 0
        %553 = vmatpush1.bf16.msra.mxu0 %v545
        %554 = vmatprep.subr.bf16.mxu0 0
        %555 = vmatpush1.bf16.msra.mxu0 %v546
        %556 = vmatprep.subr.bf16.mxu0 0
        %557 = vmatpush1.bf16.msra.mxu0 0
        %558 = vmatprep.subr.bf16.mxu0 0
        %559 = vmatpush1.bf16.msra.mxu0 0
        %560 = vmatprep.subr.bf16.mxu0 0
        %561 = vmatpush1.bf16.msra.mxu0 0
        %562 = vmatprep.subr.bf16.mxu0 0
        %563 = vmatpush1.bf16.msra.mxu0 0
        %564 = vmatprep.subr.bf16.mxu0 0
        %565 = vmatpush1.bf16.msra.mxu0 0
        %566 = vmatprep.subr.bf16.mxu0 0
        %567 = vmatpush1.bf16.msra.mxu0 0
        %568 = vmatprep.subr.bf16.mxu0 0
        %569 = vmatpush1.bf16.msra.mxu0 0
        %570 = vmatprep.subr.bf16.mxu0 0
        %571 = vmatpush1.bf16.msra.mxu0 0
        %572 = vmatprep.subr.bf16.mxu0 0
        %573 = vmatpush1.bf16.msra.mxu0 0
        %574 = vmatprep.subr.bf16.mxu0 0
        %575 = vmatpush1.bf16.msra.mxu0 0
        %576 = vmatprep.subr.bf16.mxu0 0
        %577 = vmatpush1.bf16.msra.mxu0 0
        %578 = vmatprep.subr.bf16.mxu0 0
        %579 = vmatpush1.bf16.msra.mxu0 0
        %580 = vmatprep.subr.bf16.mxu0 0
        %581 = vmatpush1.bf16.msra.mxu0 0
        %582 = vmatprep.subr.bf16.mxu0 0
        %583 = vmatpush1.bf16.msra.mxu0 0
        %584 = vmatprep.mubr.bf16.mxu0 0
        %585 = vmatmul.mubr.bf16.gmra.mrb[0].mxu0 %v550
        %v586 = vpop.f32.mrb[0].mxu0
        %v587 = vadd.f32 %v535, %v586
        %v588 = vpop.f32.mrb[0].mxu0
        %v589 = vpop.f32.mrb[0].mxu0
        %v590 = vpop.f32.mrb[0].mxu0
        %591 = vdwg.mxu0
        %v592 = vld [vmem:[%s7] sm:$0xf]
        %v593 = vld [vmem:[%s7 + $0x4] sm:$0xf]
        %v594 = vld [vmem:[%s7 + $0x8] sm:$0xf]
        %v595 = vld [vmem:[%s7 + $0xc] sm:$0xf]
        %v596 = vld [vmem:[%s8] sm:$0x1]
        %v598 = vlaneseq
        %v599 = vshrl.u32 %v598, 7
        %v600 = vsub.s32 0, %v599
        %v601 = vrot.slane %v596, %v600
        %v607 = vunpack.c.l.b16 %v592
        %v608 = vunpack.c.l.b16 %v593
        %v609 = vunpack.c.l.b16 %v594
        %v610 = vunpack.c.l.b16 %v595
        %v611 = vpack.c.b16 %v608, %v607
        %v612 = vpack.c.b16 %v610, %v609
        %615 = vmatprep.subr.bf16.mxu0 0
        %616 = vmatpush1.bf16.msra.mxu0 %v611
        %617 = vmatprep.subr.bf16.mxu0 0
        %618 = vmatpush1.bf16.msra.mxu0 %v612
        %619 = vmatprep.subr.bf16.mxu0 0
        %620 = vmatpush1.bf16.msra.mxu0 0
        %621 = vmatprep.subr.bf16.mxu0 0
        %622 = vmatpush1.bf16.msra.mxu0 0
        %623 = vmatprep.subr.bf16.mxu0 0
        %624 = vmatpush1.bf16.msra.mxu0 0
        %625 = vmatprep.subr.bf16.mxu0 0
        %626 = vmatpush1.bf16.msra.mxu0 0
        %627 = vmatprep.subr.bf16.mxu0 0
        %628 = vmatpush1.bf16.msra.mxu0 0
        %629 = vmatprep.subr.bf16.mxu0 0
        %630 = vmatpush1.bf16.msra.mxu0 0
        %631 = vmatprep.subr.bf16.mxu0 0
        %632 = vmatpush1.bf16.msra.mxu0 0
        %633 = vmatprep.subr.bf16.mxu0 0
        %634 = vmatpush1.bf16.msra.mxu0 0
        %635 = vmatprep.subr.bf16.mxu0 0
        %636 = vmatpush1.bf16.msra.mxu0 0
        %637 = vmatprep.subr.bf16.mxu0 0
        %638 = vmatpush1.bf16.msra.mxu0 0
        %639 = vmatprep.subr.bf16.mxu0 0
        %640 = vmatpush1.bf16.msra.mxu0 0
        %641 = vmatprep.subr.bf16.mxu0 0
        %642 = vmatpush1.bf16.msra.mxu0 0
        %643 = vmatprep.subr.bf16.mxu0 0
        %644 = vmatpush1.bf16.msra.mxu0 0
        %645 = vmatprep.subr.bf16.mxu0 0
        %646 = vmatpush1.bf16.msra.mxu0 0
        %647 = vmatprep.mubr.bf16.mxu0 0
        %648 = vmatmul.mubr.bf16.gmra.mrb[0].mxu0 %v550
        %v649 = vpop.f32.mrb[0].mxu0
        %v650 = vadd.f32 %v601, %v649
        %v651 = vpop.f32.mrb[0].mxu0
        %v652 = vpop.f32.mrb[0].mxu0
        %v653 = vpop.f32.mrb[0].mxu0
        %654 = vdwg.mxu0
        %v655 = vpack.c.bf16 %v521, %v521
        %v656 = vpack.c.bf16 %v587, %v587
        %vm657 = vcmask 130048
        %v659 = vsel %vm657, %v655, 0
        %v662 = vsel %vm657, %v656, 0
        %664 = vmatprep.subr.bf16.mxu0 0
        %665 = vmatpush1.bf16.xpose.msra.mxu0 %v662
        %666 = vmatprep.subr.bf16.mxu0 0
        %667 = vmatpush1.bf16.xpose.msra.mxu0 0
        %668 = vmatprep.subr.bf16.mxu0 0
        %669 = vmatpush1.bf16.xpose.msra.mxu0 0
        %670 = vmatprep.subr.bf16.mxu0 0
        %671 = vmatpush1.bf16.xpose.msra.mxu0 0
        %672 = vmatprep.subr.bf16.mxu0 0
        %673 = vmatpush1.bf16.xpose.msra.mxu0 0
        %674 = vmatprep.subr.bf16.mxu0 0
        %675 = vmatpush1.bf16.xpose.msra.mxu0 0
        %676 = vmatprep.subr.bf16.mxu0 0
        %677 = vmatpush1.bf16.xpose.msra.mxu0 0
        %678 = vmatprep.subr.bf16.mxu0 0
        %679 = vmatpush1.bf16.xpose.msra.mxu0 0
        %680 = vmatprep.subr.bf16.mxu0 0
        %681 = vmatpush1.bf16.xpose.msra.mxu0 0
        %682 = vmatprep.subr.bf16.mxu0 0
        %683 = vmatpush1.bf16.xpose.msra.mxu0 0
        %684 = vmatprep.subr.bf16.mxu0 0
        %685 = vmatpush1.bf16.xpose.msra.mxu0 0
        %686 = vmatprep.subr.bf16.mxu0 0
        %687 = vmatpush1.bf16.xpose.msra.mxu0 0
        %688 = vmatprep.subr.bf16.mxu0 0
        %689 = vmatpush1.bf16.xpose.msra.mxu0 0
        %690 = vmatprep.subr.bf16.mxu0 0
        %691 = vmatpush1.bf16.xpose.msra.mxu0 0
        %692 = vmatprep.subr.bf16.mxu0 0
        %693 = vmatpush1.bf16.xpose.msra.mxu0 0
        %694 = vmatprep.subr.bf16.mxu0 0
        %695 = vmatpush1.bf16.xpose.msra.mxu0 0
        %696 = vmatprep.mubr.bf16.mxu0 0
        %697 = vmatmul.mubr.bf16.gmra.mrb[0].mxu0 %v659
        %v698 = vpop.f32.mrb[0].mxu0
        %v699 = vadd.f32 0.0, %v698
        %v700 = vpop.f32.mrb[0].mxu0
        %v701 = vpop.f32.mrb[0].mxu0
        %v702 = vpop.f32.mrb[0].mxu0
        %703 = vdwg.mxu0
        %v704 = vsel %vm458, 16843009, 0
        %v705 = vunpack.c.0.s8 %v704
        %vm706 = vcmp.ne.s32.totalorder %v705, 0
        %v707 = vsel %vm706, -1e+09, %v699
        %vm708 = vcmask 64512
        %v709 = vsel %vm708, %v707, -inf
        %710 = vmax.xlane.f32.xlu0 %v709
        %v711 = vpop.xlane.xlu0 %710
        %v712 = vsub.f32 %v707, %v711
        %v713 = vmul.f32 %v712, 1.442695
        %v714 = vpow.pop %v713
        %v715 = vsel %vm708, %v714, 0.0
        %716 = vadd.xlane.f32.xlu0 %v715
        %v717 = vpop.xlane.xlu0 %716
        %v718 = vrcp.pop %v717
        %v719 = vmul.f32 %v714, %v718
        %v720 = vpack.c.bf16 %v719, %v719
        %v721 = vpack.c.bf16 %v650, %v650
        %v723 = vsel %vm708, %v720, 0
        %vm725 = vcmask 1043456
        %v727 = vsel %vm725, %v721, 0
        %729 = vmatprep.subr.bf16.mxu0 0
        %730 = vmatpush1.bf16.msra.mxu0 %v727
        %731 = vmatprep.subr.bf16.mxu0 0
        %732 = vmatpush1.bf16.msra.mxu0 0
        %733 = vmatprep.subr.bf16.mxu0 0
        %734 = vmatpush1.bf16.msra.mxu0 0
        %735 = vmatprep.subr.bf16.mxu0 0
        %736 = vmatpush1.bf16.msra.mxu0 0
        %737 = vmatprep.subr.bf16.mxu0 0
        %738 = vmatpush1.bf16.msra.mxu0 0
        %739 = vmatprep.subr.bf16.mxu0 0
        %740 = vmatpush1.bf16.msra.mxu0 0
        %741 = vmatprep.subr.bf16.mxu0 0
        %742 = vmatpush1.bf16.msra.mxu0 0
        %743 = vmatprep.subr.bf16.mxu0 0
        %744 = vmatpush1.bf16.msra.mxu0 0
        %745 = vmatprep.subr.bf16.mxu0 0
        %746 = vmatpush1.bf16.msra.mxu0 0
        %747 = vmatprep.subr.bf16.mxu0 0
        %748 = vmatpush1.bf16.msra.mxu0 0
        %749 = vmatprep.subr.bf16.mxu0 0
        %750 = vmatpush1.bf16.msra.mxu0 0
        %751 = vmatprep.subr.bf16.mxu0 0
        %752 = vmatpush1.bf16.msra.mxu0 0
        %753 = vmatprep.subr.bf16.mxu0 0
        %754 = vmatpush1.bf16.msra.mxu0 0
        %755 = vmatprep.subr.bf16.mxu0 0
        %756 = vmatpush1.bf16.msra.mxu0 0
        %757 = vmatprep.subr.bf16.mxu0 0
        %758 = vmatpush1.bf16.msra.mxu0 0
        %759 = vmatprep.subr.bf16.mxu0 0
        %760 = vmatpush1.bf16.msra.mxu0 0
        %761 = vmatprep.mubr.bf16.mxu0 0
        %762 = vmatmul.mubr.bf16.gmra.mrb[0].mxu0 %v723
        %v763 = vpop.f32.mrb[0].mxu0
        %v764 = vadd.f32 0.0, %v763
        %v765 = vpop.f32.mrb[0].mxu0
        %v766 = vpop.f32.mrb[0].mxu0
        %v767 = vpop.f32.mrb[0].mxu0
        %768 = vdwg.mxu0
        %769 = vst.msk [vmem:[#allocation2] sm:$0xff] %vm657, %v764
        %s770 = scalar_lea.vmem %s3, 16
        %v771 = vld [vmem:[%s770] sm:$0xf]
        %v772 = vld [vmem:[%s770 + $0x4] sm:$0xf]
        %v773 = vld [vmem:[%s770 + $0x8] sm:$0xf]
        %v774 = vld [vmem:[%s770 + $0xc] sm:$0xf]
        %s775 = scalar_lea.vmem %s4, 1
        %v776 = vld [vmem:[%s775] sm:$0x1]
        %v778 = vlaneseq
        %v779 = vshrl.u32 %v778, 7
        %v780 = vsub.s32 0, %v779
        %v781 = vrot.slane %v776, %v780
        %v787 = vunpack.c.l.b16 %v771
        %v788 = vunpack.c.l.b16 %v772
        %v789 = vunpack.c.l.b16 %v773
        %v790 = vunpack.c.l.b16 %v774
        %v791 = vpack.c.b16 %v788, %v787
        %v792 = vpack.c.b16 %v790, %v789
        %795 = vmatprep.subr.bf16.mxu0 0
        %796 = vmatpush1.bf16.msra.mxu0 %v791
        %797 = vmatprep.subr.bf16.mxu0 0
        %798 = vmatpush1.bf16.msra.mxu0 %v792
        %799 = vmatprep.subr.bf16.mxu0 0
        %800 = vmatpush1.bf16.msra.mxu0 0
        %801 = vmatprep.subr.bf16.mxu0 0
        %802 = vmatpush1.bf16.msra.mxu0 0
        %803 = vmatprep.subr.bf16.mxu0 0
        %804 = vmatpush1.bf16.msra.mxu0 0
        %805 = vmatprep.subr.bf16.mxu0 0
        %806 = vmatpush1.bf16.msra.mxu0 0
        %807 = vmatprep.subr.bf16.mxu0 0
        %808 = vmatpush1.bf16.msra.mxu0 0
        %809 = vmatprep.subr.bf16.mxu0 0
        %810 = vmatpush1.bf16.msra.mxu0 0
        %811 = vmatprep.subr.bf16.mxu0 0
        %812 = vmatpush1.bf16.msra.mxu0 0
        %813 = vmatprep.subr.bf16.mxu0 0
        %814 = vmatpush1.bf16.msra.mxu0 0
        %815 = vmatprep.subr.bf16.mxu0 0
        %816 = vmatpush1.bf16.msra.mxu0 0
        %817 = vmatprep.subr.bf16.mxu0 0
        %818 = vmatpush1.bf16.msra.mxu0 0
        %819 = vmatprep.subr.bf16.mxu0 0
        %820 = vmatpush1.bf16.msra.mxu0 0
        %821 = vmatprep.subr.bf16.mxu0 0
        %822 = vmatpush1.bf16.msra.mxu0 0
        %823 = vmatprep.subr.bf16.mxu0 0
        %824 = vmatpush1.bf16.msra.mxu0 0
        %825 = vmatprep.subr.bf16.mxu0 0
        %826 = vmatpush1.bf16.msra.mxu0 0
        %827 = vmatprep.mubr.bf16.mxu0 0
        %828 = vmatmul.mubr.bf16.gmra.mrb[0].mxu0 %v484
        %v829 = vpop.f32.mrb[0].mxu0
        %v830 = vadd.f32 %v781, %v829
        %v831 = vpop.f32.mrb[0].mxu0
        %v832 = vpop.f32.mrb[0].mxu0
        %v833 = vpop.f32.mrb[0].mxu0
        %834 = vdwg.mxu0
        %s835 = scalar_lea.vmem %s5, 16
        %v836 = vld [vmem:[%s835] sm:$0xf]
        %v837 = vld [vmem:[%s835 + $0x4] sm:$0xf]
        %v838 = vld [vmem:[%s835 + $0x8] sm:$0xf]
        %v839 = vld [vmem:[%s835 + $0xc] sm:$0xf]
        %s840 = scalar_lea.vmem %s6, 1
        %v841 = vld [vmem:[%s840] sm:$0x1]
        %v843 = vlaneseq
        %v844 = vshrl.u32 %v843, 7
        %v845 = vsub.s32 0, %v844
        %v846 = vrot.slane %v841, %v845
        %v852 = vunpack.c.l.b16 %v836
        %v853 = vunpack.c.l.b16 %v837
        %v854 = vunpack.c.l.b16 %v838
        %v855 = vunpack.c.l.b16 %v839
        %v856 = vpack.c.b16 %v853, %v852
        %v857 = vpack.c.b16 %v855, %v854
        %860 = vmatprep.subr.bf16.mxu0 0
        %861 = vmatpush1.bf16.msra.mxu0 %v856
        %862 = vmatprep.subr.bf16.mxu0 0
        %863 = vmatpush1.bf16.msra.mxu0 %v857
        %864 = vmatprep.subr.bf16.mxu0 0
        %865 = vmatpush1.bf16.msra.mxu0 0
        %866 = vmatprep.subr.bf16.mxu0 0
        %867 = vmatpush1.bf16.msra.mxu0 0
        %868 = vmatprep.subr.bf16.mxu0 0
        %869 = vmatpush1.bf16.msra.mxu0 0
        %870 = vmatprep.subr.bf16.mxu0 0
        %871 = vmatpush1.bf16.msra.mxu0 0
        %872 = vmatprep.subr.bf16.mxu0 0
        %873 = vmatpush1.bf16.msra.mxu0 0
        %874 = vmatprep.subr.bf16.mxu0 0
        %875 = vmatpush1.bf16.msra.mxu0 0
        %876 = vmatprep.subr.bf16.mxu0 0
        %877 = vmatpush1.bf16.msra.mxu0 0
        %878 = vmatprep.subr.bf16.mxu0 0
        %879 = vmatpush1.bf16.msra.mxu0 0
        %880 = vmatprep.subr.bf16.mxu0 0
        %881 = vmatpush1.bf16.msra.mxu0 0
        %882 = vmatprep.subr.bf16.mxu0 0
        %883 = vmatpush1.bf16.msra.mxu0 0
        %884 = vmatprep.subr.bf16.mxu0 0
        %885 = vmatpush1.bf16.msra.mxu0 0
        %886 = vmatprep.subr.bf16.mxu0 0
        %887 = vmatpush1.bf16.msra.mxu0 0
        %888 = vmatprep.subr.bf16.mxu0 0
        %889 = vmatpush1.bf16.msra.mxu0 0
        %890 = vmatprep.subr.bf16.mxu0 0
        %891 = vmatpush1.bf16.msra.mxu0 0
        %892 = vmatprep.mubr.bf16.mxu0 0
        %893 = vmatmul.mubr.bf16.gmra.mrb[0].mxu0 %v550
        %v894 = vpop.f32.mrb[0].mxu0
        %v895 = vadd.f32 %v846, %v894
        %v896 = vpop.f32.mrb[0].mxu0
        %v897 = vpop.f32.mrb[0].mxu0
        %v898 = vpop.f32.mrb[0].mxu0
        %899 = vdwg.mxu0
        %s900 = scalar_lea.vmem %s7, 16
        %v901 = vld [vmem:[%s900] sm:$0xf]
        %v902 = vld [vmem:[%s900 + $0x4] sm:$0xf]
        %v903 = vld [vmem:[%s900 + $0x8] sm:$0xf]
        %v904 = vld [vmem:[%s900 + $0xc] sm:$0xf]
        %s905 = scalar_lea.vmem %s8, 1
        %v906 = vld [vmem:[%s905] sm:$0x1]
        %v908 = vlaneseq
        %v909 = vshrl.u32 %v908, 7
        %v910 = vsub.s32 0, %v909
        %v911 = vrot.slane %v906, %v910
        %v917 = vunpack.c.l.b16 %v901
        %v918 = vunpack.c.l.b16 %v902
        %v919 = vunpack.c.l.b16 %v903
        %v920 = vunpack.c.l.b16 %v904
        %v921 = vpack.c.b16 %v918, %v917
        %v922 = vpack.c.b16 %v920, %v919
        %925 = vmatprep.subr.bf16.mxu0 0
        %926 = vmatpush1.bf16.msra.mxu0 %v921
        %927 = vmatprep.subr.bf16.mxu0 0
        %928 = vmatpush1.bf16.msra.mxu0 %v922
        %929 = vmatprep.subr.bf16.mxu0 0
        %930 = vmatpush1.bf16.msra.mxu0 0
        %931 = vmatprep.subr.bf16.mxu0 0
        %932 = vmatpush1.bf16.msra.mxu0 0
        %933 = vmatprep.subr.bf16.mxu0 0
        %934 = vmatpush1.bf16.msra.mxu0 0
        %935 = vmatprep.subr.bf16.mxu0 0
        %936 = vmatpush1.bf16.msra.mxu0 0
        %937 = vmatprep.subr.bf16.mxu0 0
        %938 = vmatpush1.bf16.msra.mxu0 0
        %939 = vmatprep.subr.bf16.mxu0 0
        %940 = vmatpush1.bf16.msra.mxu0 0
        %941 = vmatprep.subr.bf16.mxu0 0
        %942 = vmatpush1.bf16.msra.mxu0 0
        %943 = vmatprep.subr.bf16.mxu0 0
        %944 = vmatpush1.bf16.msra.mxu0 0
        %945 = vmatprep.subr.bf16.mxu0 0
        %946 = vmatpush1.bf16.msra.mxu0 0
        %947 = vmatprep.subr.bf16.mxu0 0
        %948 = vmatpush1.bf16.msra.mxu0 0
        %949 = vmatprep.subr.bf16.mxu0 0
        %950 = vmatpush1.bf16.msra.mxu0 0
        %951 = vmatprep.subr.bf16.mxu0 0
        %952 = vmatpush1.bf16.msra.mxu0 0
        %953 = vmatprep.subr.bf16.mxu0 0
        %954 = vmatpush1.bf16.msra.mxu0 0
        %955 = vmatprep.subr.bf16.mxu0 0
        %956 = vmatpush1.bf16.msra.mxu0 0
        %957 = vmatprep.mubr.bf16.mxu0 0
        %958 = vmatmul.mubr.bf16.gmra.mrb[0].mxu0 %v550
        %v959 = vpop.f32.mrb[0].mxu0
        %v960 = vadd.f32 %v911, %v959
        %v961 = vpop.f32.mrb[0].mxu0
        %v962 = vpop.f32.mrb[0].mxu0
        %v963 = vpop.f32.mrb[0].mxu0
        %964 = vdwg.mxu0
        %v965 = vpack.c.bf16 %v830, %v830
        %v966 = vpack.c.bf16 %v895, %v895
        %v968 = vsel %vm657, %v965, 0
        %v971 = vsel %vm657, %v966, 0
        %973 = vmatprep.subr.bf16.mxu0 0
        %974 = vmatpush1.bf16.xpose.msra.mxu0 %v971
        %975 = vmatprep.subr.bf16.mxu0 0
        %976 = vmatpush1.bf16.xpose.msra.mxu0 0
        %977 = vmatprep.subr.bf16.mxu0 0
        %978 = vmatpush1.bf16.xpose.msra.mxu0 0
        %979 = vmatprep.subr.bf16.mxu0 0
        %980 = vmatpush1.bf16.xpose.msra.mxu0 0
        %981 = vmatprep.subr.bf16.mxu0 0
        %982 = vmatpush1.bf16.xpose.msra.mxu0 0
        %983 = vmatprep.subr.bf16.mxu0 0
        %984 = vmatpush1.bf16.xpose.msra.mxu0 0
        %985 = vmatprep.subr.bf16.mxu0 0
        %986 = vmatpush1.bf16.xpose.msra.mxu0 0
        %987 = vmatprep.subr.bf16.mxu0 0
        %988 = vmatpush1.bf16.xpose.msra.mxu0 0
        %989 = vmatprep.subr.bf16.mxu0 0
        %990 = vmatpush1.bf16.xpose.msra.mxu0 0
        %991 = vmatprep.subr.bf16.mxu0 0
        %992 = vmatpush1.bf16.xpose.msra.mxu0 0
        %993 = vmatprep.subr.bf16.mxu0 0
        %994 = vmatpush1.bf16.xpose.msra.mxu0 0
        %995 = vmatprep.subr.bf16.mxu0 0
        %996 = vmatpush1.bf16.xpose.msra.mxu0 0
        %997 = vmatprep.subr.bf16.mxu0 0
        %998 = vmatpush1.bf16.xpose.msra.mxu0 0
        %999 = vmatprep.subr.bf16.mxu0 0
        %1000 = vmatpush1.bf16.xpose.msra.mxu0 0
        %1001 = vmatprep.subr.bf16.mxu0 0
        %1002 = vmatpush1.bf16.xpose.msra.mxu0 0
        %1003 = vmatprep.subr.bf16.mxu0 0
        %1004 = vmatpush1.bf16.xpose.msra.mxu0 0
        %1005 = vmatprep.mubr.bf16.mxu0 0
        %1006 = vmatmul.mubr.bf16.gmra.mrb[0].mxu0 %v968
        %v1007 = vpop.f32.mrb[0].mxu0
        %v1008 = vadd.f32 0.0, %v1007
        %v1009 = vpop.f32.mrb[0].mxu0
        %v1010 = vpop.f32.mrb[0].mxu0
        %v1011 = vpop.f32.mrb[0].mxu0
        %1012 = vdwg.mxu0
        %v1013 = vsel %vm706, -1e+09, %v1008
        %v1014 = vsel %vm708, %v1013, -inf
        %1015 = vmax.xlane.f32.xlu0 %v1014
        %v1016 = vpop.xlane.xlu0 %1015
        %v1017 = vsub.f32 %v1013, %v1016
        %v1018 = vmul.f32 %v1017, 1.442695
        %v1019 = vpow.pop %v1018
        %v1020 = vsel %vm708, %v1019, 0.0
        %1021 = vadd.xlane.f32.xlu0 %v1020
        %v1022 = vpop.xlane.xlu0 %1021
        %v1023 = vrcp.pop %v1022
        %v1024 = vmul.f32 %v1019, %v1023
        %v1025 = vpack.c.bf16 %v1024, %v1024
        %v1026 = vpack.c.bf16 %v960, %v960
        %v1028 = vsel %vm708, %v1025, 0
        %v1031 = vsel %vm725, %v1026, 0
        %1033 = vmatprep.subr.bf16.mxu0 0
        %1034 = vmatpush1.bf16.msra.mxu0 %v1031
        %1035 = vmatprep.subr.bf16.mxu0 0
        %1036 = vmatpush1.bf16.msra.mxu0 0
        %1037 = vmatprep.subr.bf16.mxu0 0
        %1038 = vmatpush1.bf16.msra.mxu0 0
        %1039 = vmatprep.subr.bf16.mxu0 0
        %1040 = vmatpush1.bf16.msra.mxu0 0
        %1041 = vmatprep.subr.bf16.mxu0 0
        %1042 = vmatpush1.bf16.msra.mxu0 0
        %1043 = vmatprep.subr.bf16.mxu0 0
        %1044 = vmatpush1.bf16.msra.mxu0 0
        %1045 = vmatprep.subr.bf16.mxu0 0
        %1046 = vmatpush1.bf16.msra.mxu0 0
        %1047 = vmatprep.subr.bf16.mxu0 0
        %1048 = vmatpush1.bf16.msra.mxu0 0
        %1049 = vmatprep.subr.bf16.mxu0 0
        %1050 = vmatpush1.bf16.msra.mxu0 0
        %1051 = vmatprep.subr.bf16.mxu0 0
        %1052 = vmatpush1.bf16.msra.mxu0 0
        %1053 = vmatprep.subr.bf16.mxu0 0
        %1054 = vmatpush1.bf16.msra.mxu0 0
        %1055 = vmatprep.subr.bf16.mxu0 0
        %1056 = vmatpush1.bf16.msra.mxu0 0
        %1057 = vmatprep.subr.bf16.mxu0 0
        %1058 = vmatpush1.bf16.msra.mxu0 0
        %1059 = vmatprep.subr.bf16.mxu0 0
        %1060 = vmatpush1.bf16.msra.mxu0 0
        %1061 = vmatprep.subr.bf16.mxu0 0
        %1062 = vmatpush1.bf16.msra.mxu0 0
        %1063 = vmatprep.subr.bf16.mxu0 0
        %1064 = vmatpush1.bf16.msra.mxu0 0
        %1065 = vmatprep.mubr.bf16.mxu0 0
        %1066 = vmatmul.mubr.bf16.gmra.mrb[0].mxu0 %v1028
        %v1067 = vpop.f32.mrb[0].mxu0
        %v1068 = vadd.f32 0.0, %v1067
        %v1069 = vpop.f32.mrb[0].mxu0
        %v1070 = vpop.f32.mrb[0].mxu0
        %v1071 = vpop.f32.mrb[0].mxu0
        %1072 = vdwg.mxu0
        %1074 = vrot.lane.b32.xlu0 %v1068, 16
        %v1075 = vpop.permute.xlu0 %1074
        %vm1077 = vcmask 261248
        %1078 = vst.msk [vmem:[#allocation2] sm:$0xff] %vm1077, %v1075
        %s1079 = scalar_lea.vmem %s3, 32
        %v1080 = vld [vmem:[%s1079] sm:$0xf]
        %v1081 = vld [vmem:[%s1079 + $0x4] sm:$0xf]
        %v1082 = vld [vmem:[%s1079 + $0x8] sm:$0xf]
        %v1083 = vld [vmem:[%s1079 + $0xc] sm:$0xf]
        %s1084 = scalar_lea.vmem %s4, 2
        %v1085 = vld [vmem:[%s1084] sm:$0x1]
        %v1087 = vlaneseq
        %v1088 = vshrl.u32 %v1087, 7
        %v1089 = vsub.s32 0, %v1088
        %v1090 = vrot.slane %v1085, %v1089
        %v1096 = vunpack.c.l.b16 %v1080
        %v1097 = vunpack.c.l.b16 %v1081
        %v1098 = vunpack.c.l.b16 %v1082
        %v1099 = vunpack.c.l.b16 %v1083
        %v1100 = vpack.c.b16 %v1097, %v1096
        %v1101 = vpack.c.b16 %v1099, %v1098
        %1104 = vmatprep.subr.bf16.mxu0 0
        %1105 = vmatpush1.bf16.msra.mxu0 %v1100
        %1106 = vmatprep.subr.bf16.mxu0 0
        %1107 = vmatpush1.bf16.msra.mxu0 %v1101
        %1108 = vmatprep.subr.bf16.mxu0 0
        %1109 = vmatpush1.bf16.msra.mxu0 0
        %1110 = vmatprep.subr.bf16.mxu0 0
        %1111 = vmatpush1.bf16.msra.mxu0 0
        %1112 = vmatprep.subr.bf16.mxu0 0
        %1113 = vmatpush1.bf16.msra.mxu0 0
        %1114 = vmatprep.subr.bf16.mxu0 0
        %1115 = vmatpush1.bf16.msra.mxu0 0
        %1116 = vmatprep.subr.bf16.mxu0 0
        %1117 = vmatpush1.bf16.msra.mxu0 0
        %1118 = vmatprep.subr.bf16.mxu0 0
        %1119 = vmatpush1.bf16.msra.mxu0 0
        %1120 = vmatprep.subr.bf16.mxu0 0
        %1121 = vmatpush1.bf16.msra.mxu0 0
        %1122 = vmatprep.subr.bf16.mxu0 0
        %1123 = vmatpush1.bf16.msra.mxu0 0
        %1124 = vmatprep.subr.bf16.mxu0 0
        %1125 = vmatpush1.bf16.msra.mxu0 0
        %1126 = vmatprep.subr.bf16.mxu0 0
        %1127 = vmatpush1.bf16.msra.mxu0 0
        %1128 = vmatprep.subr.bf16.mxu0 0
        %1129 = vmatpush1.bf16.msra.mxu0 0
        %1130 = vmatprep.subr.bf16.mxu0 0
        %1131 = vmatpush1.bf16.msra.mxu0 0
        %1132 = vmatprep.subr.bf16.mxu0 0
        %1133 = vmatpush1.bf16.msra.mxu0 0
        %1134 = vmatprep.subr.bf16.mxu0 0
        %1135 = vmatpush1.bf16.msra.mxu0 0
        %1136 = vmatprep.mubr.bf16.mxu0 0
        %1137 = vmatmul.mubr.bf16.gmra.mrb[0].mxu0 %v484
        %v1138 = vpop.f32.mrb[0].mxu0
        %v1139 = vadd.f32 %v1090, %v1138
        %v1140 = vpop.f32.mrb[0].mxu0
        %v1141 = vpop.f32.mrb[0].mxu0
        %v1142 = vpop.f32.mrb[0].mxu0
        %1143 = vdwg.mxu0
        %s1144 = scalar_lea.vmem %s5, 32
        %v1145 = vld [vmem:[%s1144] sm:$0xf]
        %v1146 = vld [vmem:[%s1144 + $0x4] sm:$0xf]
        %v1147 = vld [vmem:[%s1144 + $0x8] sm:$0xf]
        %v1148 = vld [vmem:[%s1144 + $0xc] sm:$0xf]
        %s1149 = scalar_lea.vmem %s6, 2
        %v1150 = vld [vmem:[%s1149] sm:$0x1]
        %v1152 = vlaneseq
        %v1153 = vshrl.u32 %v1152, 7
        %v1154 = vsub.s32 0, %v1153
        %v1155 = vrot.slane %v1150, %v1154
        %v1161 = vunpack.c.l.b16 %v1145
        %v1162 = vunpack.c.l.b16 %v1146
        %v1163 = vunpack.c.l.b16 %v1147
        %v1164 = vunpack.c.l.b16 %v1148
        %v1165 = vpack.c.b16 %v1162, %v1161
        %v1166 = vpack.c.b16 %v1164, %v1163
        %1169 = vmatprep.subr.bf16.mxu0 0
        %1170 = vmatpush1.bf16.msra.mxu0 %v1165
        %1171 = vmatprep.subr.bf16.mxu0 0
        %1172 = vmatpush1.bf16.msra.mxu0 %v1166
        %1173 = vmatprep.subr.bf16.mxu0 0
        %1174 = vmatpush1.bf16.msra.mxu0 0
        %1175 = vmatprep.subr.bf16.mxu0 0
        %1176 = vmatpush1.bf16.msra.mxu0 0
        %1177 = vmatprep.subr.bf16.mxu0 0
        %1178 = vmatpush1.bf16.msra.mxu0 0
        %1179 = vmatprep.subr.bf16.mxu0 0
        %1180 = vmatpush1.bf16.msra.mxu0 0
        %1181 = vmatprep.subr.bf16.mxu0 0
        %1182 = vmatpush1.bf16.msra.mxu0 0
        %1183 = vmatprep.subr.bf16.mxu0 0
        %1184 = vmatpush1.bf16.msra.mxu0 0
        %1185 = vmatprep.subr.bf16.mxu0 0
        %1186 = vmatpush1.bf16.msra.mxu0 0
        %1187 = vmatprep.subr.bf16.mxu0 0
        %1188 = vmatpush1.bf16.msra.mxu0 0
        %1189 = vmatprep.subr.bf16.mxu0 0
        %1190 = vmatpush1.bf16.msra.mxu0 0
        %1191 = vmatprep.subr.bf16.mxu0 0
        %1192 = vmatpush1.bf16.msra.mxu0 0
        %1193 = vmatprep.subr.bf16.mxu0 0
        %1194 = vmatpush1.bf16.msra.mxu0 0
        %1195 = vmatprep.subr.bf16.mxu0 0
        %1196 = vmatpush1.bf16.msra.mxu0 0
        %1197 = vmatprep.subr.bf16.mxu0 0
        %1198 = vmatpush1.bf16.msra.mxu0 0
        %1199 = vmatprep.subr.bf16.mxu0 0
        %1200 = vmatpush1.bf16.msra.mxu0 0
        %1201 = vmatprep.mubr.bf16.mxu0 0
        %1202 = vmatmul.mubr.bf16.gmra.mrb[0].mxu0 %v550
        %v1203 = vpop.f32.mrb[0].mxu0
        %v1204 = vadd.f32 %v1155, %v1203
        %v1205 = vpop.f32.mrb[0].mxu0
        %v1206 = vpop.f32.mrb[0].mxu0
        %v1207 = vpop.f32.mrb[0].mxu0
        %1208 = vdwg.mxu0
        %s1209 = scalar_lea.vmem %s7, 32
        %v1210 = vld [vmem:[%s1209] sm:$0xf]
        %v1211 = vld [vmem:[%s1209 + $0x4] sm:$0xf]
        %v1212 = vld [vmem:[%s1209 + $0x8] sm:$0xf]
        %v1213 = vld [vmem:[%s1209 + $0xc] sm:$0xf]
        %s1214 = scalar_lea.vmem %s8, 2
        %v1215 = vld [vmem:[%s1214] sm:$0x1]
        %v1217 = vlaneseq
        %v1218 = vshrl.u32 %v1217, 7
        %v1219 = vsub.s32 0, %v1218
        %v1220 = vrot.slane %v1215, %v1219
        %v1226 = vunpack.c.l.b16 %v1210
        %v1227 = vunpack.c.l.b16 %v1211
        %v1228 = vunpack.c.l.b16 %v1212
        %v1229 = vunpack.c.l.b16 %v1213
        %v1230 = vpack.c.b16 %v1227, %v1226
        %v1231 = vpack.c.b16 %v1229, %v1228
        %1234 = vmatprep.subr.bf16.mxu0 0
        %1235 = vmatpush1.bf16.msra.mxu0 %v1230
        %1236 = vmatprep.subr.bf16.mxu0 0
        %1237 = vmatpush1.bf16.msra.mxu0 %v1231
        %1238 = vmatprep.subr.bf16.mxu0 0
        %1239 = vmatpush1.bf16.msra.mxu0 0
        %1240 = vmatprep.subr.bf16.mxu0 0
        %1241 = vmatpush1.bf16.msra.mxu0 0
        %1242 = vmatprep.subr.bf16.mxu0 0
        %1243 = vmatpush1.bf16.msra.mxu0 0
        %1244 = vmatprep.subr.bf16.mxu0 0
        %1245 = vmatpush1.bf16.msra.mxu0 0
        %1246 = vmatprep.subr.bf16.mxu0 0
        %1247 = vmatpush1.bf16.msra.mxu0 0
        %1248 = vmatprep.subr.bf16.mxu0 0
        %1249 = vmatpush1.bf16.msra.mxu0 0
        %1250 = vmatprep.subr.bf16.mxu0 0
        %1251 = vmatpush1.bf16.msra.mxu0 0
        %1252 = vmatprep.subr.bf16.mxu0 0
        %1253 = vmatpush1.bf16.msra.mxu0 0
        %1254 = vmatprep.subr.bf16.mxu0 0
        %1255 = vmatpush1.bf16.msra.mxu0 0
        %1256 = vmatprep.subr.bf16.mxu0 0
        %1257 = vmatpush1.bf16.msra.mxu0 0
        %1258 = vmatprep.subr.bf16.mxu0 0
        %1259 = vmatpush1.bf16.msra.mxu0 0
        %1260 = vmatprep.subr.bf16.mxu0 0
        %1261 = vmatpush1.bf16.msra.mxu0 0
        %1262 = vmatprep.subr.bf16.mxu0 0
        %1263 = vmatpush1.bf16.msra.mxu0 0
        %1264 = vmatprep.subr.bf16.mxu0 0
        %1265 = vmatpush1.bf16.msra.mxu0 0
        %1266 = vmatprep.mubr.bf16.mxu0 0
        %1267 = vmatmul.mubr.bf16.gmra.mrb[0].mxu0 %v550
        %v1268 = vpop.f32.mrb[0].mxu0
        %v1269 = vadd.f32 %v1220, %v1268
        %v1270 = vpop.f32.mrb[0].mxu0
        %v1271 = vpop.f32.mrb[0].mxu0
        %v1272 = vpop.f32.mrb[0].mxu0
        %1273 = vdwg.mxu0
        %v1274 = vpack.c.bf16 %v1139, %v1139
        %v1275 = vpack.c.bf16 %v1204, %v1204
        %v1277 = vsel %vm657, %v1274, 0
        %v1280 = vsel %vm657, %v1275, 0
        %1282 = vmatprep.subr.bf16.mxu0 0
        %1283 = vmatpush1.bf16.xpose.msra.mxu0 %v1280
        %1284 = vmatprep.subr.bf16.mxu0 0
        %1285 = vmatpush1.bf16.xpose.msra.mxu0 0
        %1286 = vmatprep.subr.bf16.mxu0 0
        %1287 = vmatpush1.bf16.xpose.msra.mxu0 0
        %1288 = vmatprep.subr.bf16.mxu0 0
        %1289 = vmatpush1.bf16.xpose.msra.mxu0 0
        %1290 = vmatprep.subr.bf16.mxu0 0
        %1291 = vmatpush1.bf16.xpose.msra.mxu0 0
        %1292 = vmatprep.subr.bf16.mxu0 0
        %1293 = vmatpush1.bf16.xpose.msra.mxu0 0
        %1294 = vmatprep.subr.bf16.mxu0 0
        %1295 = vmatpush1.bf16.xpose.msra.mxu0 0
        %1296 = vmatprep.subr.bf16.mxu0 0
        %1297 = vmatpush1.bf16.xpose.msra.mxu0 0
        %1298 = vmatprep.subr.bf16.mxu0 0
        %1299 = vmatpush1.bf16.xpose.msra.mxu0 0
        %1300 = vmatprep.subr.bf16.mxu0 0
        %1301 = vmatpush1.bf16.xpose.msra.mxu0 0
        %1302 = vmatprep.subr.bf16.mxu0 0
        %1303 = vmatpush1.bf16.xpose.msra.mxu0 0
        %1304 = vmatprep.subr.bf16.mxu0 0
        %1305 = vmatpush1.bf16.xpose.msra.mxu0 0
        %1306 = vmatprep.subr.bf16.mxu0 0
        %1307 = vmatpush1.bf16.xpose.msra.mxu0 0
        %1308 = vmatprep.subr.bf16.mxu0 0
        %1309 = vmatpush1.bf16.xpose.msra.mxu0 0
        %1310 = vmatprep.subr.bf16.mxu0 0
        %1311 = vmatpush1.bf16.xpose.msra.mxu0 0
        %1312 = vmatprep.subr.bf16.mxu0 0
        %1313 = vmatpush1.bf16.xpose.msra.mxu0 0
        %1314 = vmatprep.mubr.bf16.mxu0 0
        %1315 = vmatmul.mubr.bf16.gmra.mrb[0].mxu0 %v1277
        %v1316 = vpop.f32.mrb[0].mxu0
        %v1317 = vadd.f32 0.0, %v1316
        %v1318 = vpop.f32.mrb[0].mxu0
        %v1319 = vpop.f32.mrb[0].mxu0
        %v1320 = vpop.f32.mrb[0].mxu0
        %1321 = vdwg.mxu0
        %v1322 = vsel %vm706, -1e+09, %v1317
        %v1323 = vsel %vm708, %v1322, -inf
        %1324 = vmax.xlane.f32.xlu0 %v1323
        %v1325 = vpop.xlane.xlu0 %1324
        %v1326 = vsub.f32 %v1322, %v1325
        %v1327 = vmul.f32 %v1326, 1.442695
        %v1328 = vpow.pop %v1327
        %v1329 = vsel %vm708, %v1328, 0.0
        %1330 = vadd.xlane.f32.xlu0 %v1329
        %v1331 = vpop.xlane.xlu0 %1330
        %v1332 = vrcp.pop %v1331
        %v1333 = vmul.f32 %v1328, %v1332
        %v1334 = vpack.c.bf16 %v1333, %v1333
        %v1335 = vpack.c.bf16 %v1269, %v1269
        %v1337 = vsel %vm708, %v1334, 0
        %v1340 = vsel %vm725, %v1335, 0
        %1342 = vmatprep.subr.bf16.mxu0 0
        %1343 = vmatpush1.bf16.msra.mxu0 %v1340
        %1344 = vmatprep.subr.bf16.mxu0 0
        %1345 = vmatpush1.bf16.msra.mxu0 0
        %1346 = vmatprep.subr.bf16.mxu0 0
        %1347 = vmatpush1.bf16.msra.mxu0 0
        %1348 = vmatprep.subr.bf16.mxu0 0
        %1349 = vmatpush1.bf16.msra.mxu0 0
        %1350 = vmatprep.subr.bf16.mxu0 0
        %1351 = vmatpush1.bf16.msra.mxu0 0
        %1352 = vmatprep.subr.bf16.mxu0 0
        %1353 = vmatpush1.bf16.msra.mxu0 0
        %1354 = vmatprep.subr.bf16.mxu0 0
        %1355 = vmatpush1.bf16.msra.mxu0 0
        %1356 = vmatprep.subr.bf16.mxu0 0
        %1357 = vmatpush1.bf16.msra.mxu0 0
        %1358 = vmatprep.subr.bf16.mxu0 0
        %1359 = vmatpush1.bf16.msra.mxu0 0
        %1360 = vmatprep.subr.bf16.mxu0 0
        %1361 = vmatpush1.bf16.msra.mxu0 0
        %1362 = vmatprep.subr.bf16.mxu0 0
        %1363 = vmatpush1.bf16.msra.mxu0 0
        %1364 = vmatprep.subr.bf16.mxu0 0
        %1365 = vmatpush1.bf16.msra.mxu0 0
        %1366 = vmatprep.subr.bf16.mxu0 0
        %1367 = vmatpush1.bf16.msra.mxu0 0
        %1368 = vmatprep.subr.bf16.mxu0 0
        %1369 = vmatpush1.bf16.msra.mxu0 0
        %1370 = vmatprep.subr.bf16.mxu0 0
        %1371 = vmatpush1.bf16.msra.mxu0 0
        %1372 = vmatprep.subr.bf16.mxu0 0
        %1373 = vmatpush1.bf16.msra.mxu0 0
        %1374 = vmatprep.mubr.bf16.mxu0 0
        %1375 = vmatmul.mubr.bf16.gmra.mrb[0].mxu0 %v1337
        %v1376 = vpop.f32.mrb[0].mxu0
        %v1377 = vadd.f32 0.0, %v1376
        %v1378 = vpop.f32.mrb[0].mxu0
        %v1379 = vpop.f32.mrb[0].mxu0
        %v1380 = vpop.f32.mrb[0].mxu0
        %1381 = vdwg.mxu0
        %1383 = vrot.lane.b32.xlu0 %v1377, 32
        %v1384 = vpop.permute.xlu0 %1383
        %vm1386 = vcmask 392448
        %1387 = vst.msk [vmem:[#allocation2] sm:$0xff] %vm1386, %v1384
        %s1388 = scalar_lea.vmem %s3, 48
        %v1389 = vld [vmem:[%s1388] sm:$0xf]
        %v1390 = vld [vmem:[%s1388 + $0x4] sm:$0xf]
        %v1391 = vld [vmem:[%s1388 + $0x8] sm:$0xf]
        %v1392 = vld [vmem:[%s1388 + $0xc] sm:$0xf]
        %s1393 = scalar_lea.vmem %s4, 3
        %v1394 = vld [vmem:[%s1393] sm:$0x1]
        %v1396 = vlaneseq
        %v1397 = vshrl.u32 %v1396, 7
        %v1398 = vsub.s32 0, %v1397
        %v1399 = vrot.slane %v1394, %v1398
        %v1405 = vunpack.c.l.b16 %v1389
        %v1406 = vunpack.c.l.b16 %v1390
        %v1407 = vunpack.c.l.b16 %v1391
        %v1408 = vunpack.c.l.b16 %v1392
        %v1409 = vpack.c.b16 %v1406, %v1405
        %v1410 = vpack.c.b16 %v1408, %v1407
        %1413 = vmatprep.subr.bf16.mxu0 0
        %1414 = vmatpush1.bf16.msra.mxu0 %v1409
        %1415 = vmatprep.subr.bf16.mxu0 0
        %1416 = vmatpush1.bf16.msra.mxu0 %v1410
        %1417 = vmatprep.subr.bf16.mxu0 0
        %1418 = vmatpush1.bf16.msra.mxu0 0
        %1419 = vmatprep.subr.bf16.mxu0 0
        %1420 = vmatpush1.bf16.msra.mxu0 0
        %1421 = vmatprep.subr.bf16.mxu0 0
        %1422 = vmatpush1.bf16.msra.mxu0 0
        %1423 = vmatprep.subr.bf16.mxu0 0
        %1424 = vmatpush1.bf16.msra.mxu0 0
        %1425 = vmatprep.subr.bf16.mxu0 0
        %1426 = vmatpush1.bf16.msra.mxu0 0
        %1427 = vmatprep.subr.bf16.mxu0 0
        %1428 = vmatpush1.bf16.msra.mxu0 0
        %1429 = vmatprep.subr.bf16.mxu0 0
        %1430 = vmatpush1.bf16.msra.mxu0 0
        %1431 = vmatprep.subr.bf16.mxu0 0
        %1432 = vmatpush1.bf16.msra.mxu0 0
        %1433 = vmatprep.subr.bf16.mxu0 0
        %1434 = vmatpush1.bf16.msra.mxu0 0
        %1435 = vmatprep.subr.bf16.mxu0 0
        %1436 = vmatpush1.bf16.msra.mxu0 0
        %1437 = vmatprep.subr.bf16.mxu0 0
        %1438 = vmatpush1.bf16.msra.mxu0 0
        %1439 = vmatprep.subr.bf16.mxu0 0
        %1440 = vmatpush1.bf16.msra.mxu0 0
        %1441 = vmatprep.subr.bf16.mxu0 0
        %1442 = vmatpush1.bf16.msra.mxu0 0
        %1443 = vmatprep.subr.bf16.mxu0 0
        %1444 = vmatpush1.bf16.msra.mxu0 0
        %1445 = vmatprep.mubr.bf16.mxu0 0
        %1446 = vmatmul.mubr.bf16.gmra.mrb[0].mxu0 %v484
        %v1447 = vpop.f32.mrb[0].mxu0
        %v1448 = vadd.f32 %v1399, %v1447
        %v1449 = vpop.f32.mrb[0].mxu0
        %v1450 = vpop.f32.mrb[0].mxu0
        %v1451 = vpop.f32.mrb[0].mxu0
        %1452 = vdwg.mxu0
        %s1453 = scalar_lea.vmem %s5, 48
        %v1454 = vld [vmem:[%s1453] sm:$0xf]
        %v1455 = vld [vmem:[%s1453 + $0x4] sm:$0xf]
        %v1456 = vld [vmem:[%s1453 + $0x8] sm:$0xf]
        %v1457 = vld [vmem:[%s1453 + $0xc] sm:$0xf]
        %s1458 = scalar_lea.vmem %s6, 3
        %v1459 = vld [vmem:[%s1458] sm:$0x1]
        %v1461 = vlaneseq
        %v1462 = vshrl.u32 %v1461, 7
        %v1463 = vsub.s32 0, %v1462
        %v1464 = vrot.slane %v1459, %v1463
        %v1470 = vunpack.c.l.b16 %v1454
        %v1471 = vunpack.c.l.b16 %v1455
        %v1472 = vunpack.c.l.b16 %v1456
        %v1473 = vunpack.c.l.b16 %v1457
        %v1474 = vpack.c.b16 %v1471, %v1470
        %v1475 = vpack.c.b16 %v1473, %v1472
        %1478 = vmatprep.subr.bf16.mxu0 0
        %1479 = vmatpush1.bf16.msra.mxu0 %v1474
        %1480 = vmatprep.subr.bf16.mxu0 0
        %1481 = vmatpush1.bf16.msra.mxu0 %v1475
        %1482 = vmatprep.subr.bf16.mxu0 0
        %1483 = vmatpush1.bf16.msra.mxu0 0
        %1484 = vmatprep.subr.bf16.mxu0 0
        %1485 = vmatpush1.bf16.msra.mxu0 0
        %1486 = vmatprep.subr.bf16.mxu0 0
        %1487 = vmatpush1.bf16.msra.mxu0 0
        %1488 = vmatprep.subr.bf16.mxu0 0
        %1489 = vmatpush1.bf16.msra.mxu0 0
        %1490 = vmatprep.subr.bf16.mxu0 0
        %1491 = vmatpush1.bf16.msra.mxu0 0
        %1492 = vmatprep.subr.bf16.mxu0 0
        %1493 = vmatpush1.bf16.msra.mxu0 0
        %1494 = vmatprep.subr.bf16.mxu0 0
        %1495 = vmatpush1.bf16.msra.mxu0 0
        %1496 = vmatprep.subr.bf16.mxu0 0
        %1497 = vmatpush1.bf16.msra.mxu0 0
        %1498 = vmatprep.subr.bf16.mxu0 0
        %1499 = vmatpush1.bf16.msra.mxu0 0
        %1500 = vmatprep.subr.bf16.mxu0 0
        %1501 = vmatpush1.bf16.msra.mxu0 0
        %1502 = vmatprep.subr.bf16.mxu0 0
        %1503 = vmatpush1.bf16.msra.mxu0 0
        %1504 = vmatprep.subr.bf16.mxu0 0
        %1505 = vmatpush1.bf16.msra.mxu0 0
        %1506 = vmatprep.subr.bf16.mxu0 0
        %1507 = vmatpush1.bf16.msra.mxu0 0
        %1508 = vmatprep.subr.bf16.mxu0 0
        %1509 = vmatpush1.bf16.msra.mxu0 0
        %1510 = vmatprep.mubr.bf16.mxu0 0
        %1511 = vmatmul.mubr.bf16.gmra.mrb[0].mxu0 %v550
        %v1512 = vpop.f32.mrb[0].mxu0
        %v1513 = vadd.f32 %v1464, %v1512
        %v1514 = vpop.f32.mrb[0].mxu0
        %v1515 = vpop.f32.mrb[0].mxu0
        %v1516 = vpop.f32.mrb[0].mxu0
        %1517 = vdwg.mxu0
        %s1518 = scalar_lea.vmem %s7, 48
        %v1519 = vld [vmem:[%s1518] sm:$0xf]
        %v1520 = vld [vmem:[%s1518 + $0x4] sm:$0xf]
        %v1521 = vld [vmem:[%s1518 + $0x8] sm:$0xf]
        %v1522 = vld [vmem:[%s1518 + $0xc] sm:$0xf]
        %s1523 = scalar_lea.vmem %s8, 3
        %v1524 = vld [vmem:[%s1523] sm:$0x1]
        %v1526 = vlaneseq
        %v1527 = vshrl.u32 %v1526, 7
        %v1528 = vsub.s32 0, %v1527
        %v1529 = vrot.slane %v1524, %v1528
        %v1535 = vunpack.c.l.b16 %v1519
        %v1536 = vunpack.c.l.b16 %v1520
        %v1537 = vunpack.c.l.b16 %v1521
        %v1538 = vunpack.c.l.b16 %v1522
        %v1539 = vpack.c.b16 %v1536, %v1535
        %v1540 = vpack.c.b16 %v1538, %v1537
        %1543 = vmatprep.subr.bf16.mxu0 0
        %1544 = vmatpush1.bf16.msra.mxu0 %v1539
        %1545 = vmatprep.subr.bf16.mxu0 0
        %1546 = vmatpush1.bf16.msra.mxu0 %v1540
        %1547 = vmatprep.subr.bf16.mxu0 0
        %1548 = vmatpush1.bf16.msra.mxu0 0
        %1549 = vmatprep.subr.bf16.mxu0 0
        %1550 = vmatpush1.bf16.msra.mxu0 0
        %1551 = vmatprep.subr.bf16.mxu0 0
        %1552 = vmatpush1.bf16.msra.mxu0 0
        %1553 = vmatprep.subr.bf16.mxu0 0
        %1554 = vmatpush1.bf16.msra.mxu0 0
        %1555 = vmatprep.subr.bf16.mxu0 0
        %1556 = vmatpush1.bf16.msra.mxu0 0
        %1557 = vmatprep.subr.bf16.mxu0 0
        %1558 = vmatpush1.bf16.msra.mxu0 0
        %1559 = vmatprep.subr.bf16.mxu0 0
        %1560 = vmatpush1.bf16.msra.mxu0 0
        %1561 = vmatprep.subr.bf16.mxu0 0
        %1562 = vmatpush1.bf16.msra.mxu0 0
        %1563 = vmatprep.subr.bf16.mxu0 0
        %1564 = vmatpush1.bf16.msra.mxu0 0
        %1565 = vmatprep.subr.bf16.mxu0 0
        %1566 = vmatpush1.bf16.msra.mxu0 0
        %1567 = vmatprep.subr.bf16.mxu0 0
        %1568 = vmatpush1.bf16.msra.mxu0 0
        %1569 = vmatprep.subr.bf16.mxu0 0
        %1570 = vmatpush1.bf16.msra.mxu0 0
        %1571 = vmatprep.subr.bf16.mxu0 0
        %1572 = vmatpush1.bf16.msra.mxu0 0
        %1573 = vmatprep.subr.bf16.mxu0 0
        %1574 = vmatpush1.bf16.msra.mxu0 0
        %1575 = vmatprep.mubr.bf16.mxu0 0
        %1576 = vmatmul.mubr.bf16.gmra.mrb[0].mxu0 %v550
        %v1577 = vpop.f32.mrb[0].mxu0
        %v1578 = vadd.f32 %v1529, %v1577
        %v1579 = vpop.f32.mrb[0].mxu0
        %v1580 = vpop.f32.mrb[0].mxu0
        %v1581 = vpop.f32.mrb[0].mxu0
        %1582 = vdwg.mxu0
        %v1583 = vpack.c.bf16 %v1448, %v1448
        %v1584 = vpack.c.bf16 %v1513, %v1513
        %v1586 = vsel %vm657, %v1583, 0
        %v1589 = vsel %vm657, %v1584, 0
        %1591 = vmatprep.subr.bf16.mxu0 0
        %1592 = vmatpush1.bf16.xpose.msra.mxu0 %v1589
        %1593 = vmatprep.subr.bf16.mxu0 0
        %1594 = vmatpush1.bf16.xpose.msra.mxu0 0
        %1595 = vmatprep.subr.bf16.mxu0 0
        %1596 = vmatpush1.bf16.xpose.msra.mxu0 0
        %1597 = vmatprep.subr.bf16.mxu0 0
        %1598 = vmatpush1.bf16.xpose.msra.mxu0 0
        %1599 = vmatprep.subr.bf16.mxu0 0
        %1600 = vmatpush1.bf16.xpose.msra.mxu0 0
        %1601 = vmatprep.subr.bf16.mxu0 0
        %1602 = vmatpush1.bf16.xpose.msra.mxu0 0
        %1603 = vmatprep.subr.bf16.mxu0 0
        %1604 = vmatpush1.bf16.xpose.msra.mxu0 0
        %1605 = vmatprep.subr.bf16.mxu0 0
        %1606 = vmatpush1.bf16.xpose.msra.mxu0 0
        %1607 = vmatprep.subr.bf16.mxu0 0
        %1608 = vmatpush1.bf16.xpose.msra.mxu0 0
        %1609 = vmatprep.subr.bf16.mxu0 0
        %1610 = vmatpush1.bf16.xpose.msra.mxu0 0
        %1611 = vmatprep.subr.bf16.mxu0 0
        %1612 = vmatpush1.bf16.xpose.msra.mxu0 0
        %1613 = vmatprep.subr.bf16.mxu0 0
        %1614 = vmatpush1.bf16.xpose.msra.mxu0 0
        %1615 = vmatprep.subr.bf16.mxu0 0
        %1616 = vmatpush1.bf16.xpose.msra.mxu0 0
        %1617 = vmatprep.subr.bf16.mxu0 0
        %1618 = vmatpush1.bf16.xpose.msra.mxu0 0
        %1619 = vmatprep.subr.bf16.mxu0 0
        %1620 = vmatpush1.bf16.xpose.msra.mxu0 0
        %1621 = vmatprep.subr.bf16.mxu0 0
        %1622 = vmatpush1.bf16.xpose.msra.mxu0 0
        %1623 = vmatprep.mubr.bf16.mxu0 0
        %1624 = vmatmul.mubr.bf16.gmra.mrb[0].mxu0 %v1586
        %v1625 = vpop.f32.mrb[0].mxu0
        %v1626 = vadd.f32 0.0, %v1625
        %v1627 = vpop.f32.mrb[0].mxu0
        %v1628 = vpop.f32.mrb[0].mxu0
        %v1629 = vpop.f32.mrb[0].mxu0
        %1630 = vdwg.mxu0
        %v1631 = vsel %vm706, -1e+09, %v1626
        %v1632 = vsel %vm708, %v1631, -inf
        %1633 = vmax.xlane.f32.xlu0 %v1632
        %v1634 = vpop.xlane.xlu0 %1633
        %v1635 = vsub.f32 %v1631, %v1634
        %v1636 = vmul.f32 %v1635, 1.442695
        %v1637 = vpow.pop %v1636
        %v1638 = vsel %vm708, %v1637, 0.0
        %1639 = vadd.xlane.f32.xlu0 %v1638
        %v1640 = vpop.xlane.xlu0 %1639
        %v1641 = vrcp.pop %v1640
        %v1642 = vmul.f32 %v1637, %v1641
        %v1643 = vpack.c.bf16 %v1642, %v1642
        %v1644 = vpack.c.bf16 %v1578, %v1578
        %v1646 = vsel %vm708, %v1643, 0
        %v1649 = vsel %vm725, %v1644, 0
        %1651 = vmatprep.subr.bf16.mxu0 0
        %1652 = vmatpush1.bf16.msra.mxu0 %v1649
        %1653 = vmatprep.subr.bf16.mxu0 0
        %1654 = vmatpush1.bf16.msra.mxu0 0
        %1655 = vmatprep.subr.bf16.mxu0 0
        %1656 = vmatpush1.bf16.msra.mxu0 0
        %1657 = vmatprep.subr.bf16.mxu0 0
        %1658 = vmatpush1.bf16.msra.mxu0 0
        %1659 = vmatprep.subr.bf16.mxu0 0
        %1660 = vmatpush1.bf16.msra.mxu0 0
        %1661 = vmatprep.subr.bf16.mxu0 0
        %1662 = vmatpush1.bf16.msra.mxu0 0
        %1663 = vmatprep.subr.bf16.mxu0 0
        %1664 = vmatpush1.bf16.msra.mxu0 0
        %1665 = vmatprep.subr.bf16.mxu0 0
        %1666 = vmatpush1.bf16.msra.mxu0 0
        %1667 = vmatprep.subr.bf16.mxu0 0
        %1668 = vmatpush1.bf16.msra.mxu0 0
        %1669 = vmatprep.subr.bf16.mxu0 0
        %1670 = vmatpush1.bf16.msra.mxu0 0
        %1671 = vmatprep.subr.bf16.mxu0 0
        %1672 = vmatpush1.bf16.msra.mxu0 0
        %1673 = vmatprep.subr.bf16.mxu0 0
        %1674 = vmatpush1.bf16.msra.mxu0 0
        %1675 = vmatprep.subr.bf16.mxu0 0
        %1676 = vmatpush1.bf16.msra.mxu0 0
        %1677 = vmatprep.subr.bf16.mxu0 0
        %1678 = vmatpush1.bf16.msra.mxu0 0
        %1679 = vmatprep.subr.bf16.mxu0 0
        %1680 = vmatpush1.bf16.msra.mxu0 0
        %1681 = vmatprep.subr.bf16.mxu0 0
        %1682 = vmatpush1.bf16.msra.mxu0 0
        %1683 = vmatprep.mubr.bf16.mxu0 0
        %1684 = vmatmul.mubr.bf16.gmra.mrb[0].mxu0 %v1646
        %v1685 = vpop.f32.mrb[0].mxu0
        %v1686 = vadd.f32 0.0, %v1685
        %v1687 = vpop.f32.mrb[0].mxu0
        %v1688 = vpop.f32.mrb[0].mxu0
        %v1689 = vpop.f32.mrb[0].mxu0
        %1690 = vdwg.mxu0
        %1692 = vrot.lane.b32.xlu0 %v1686, 48
        %v1693 = vpop.permute.xlu0 %1692
        %vm1695 = vcmask 523648
        %1696 = vst.msk [vmem:[#allocation2] sm:$0xff] %vm1695, %v1693
        %v1697 = vld [vmem:[#allocation2] sm:$0xff]
        %v1698 = vpack.c.bf16 %v1697, %v1697
        %v1699 = vld [vmem:[%s9] sm:$0xf]
        %v1700 = vld [vmem:[%s9 + $0x4] sm:$0xf]
        %v1701 = vld [vmem:[%s9 + $0x8] sm:$0xf]
        %v1702 = vld [vmem:[%s9 + $0xc] sm:$0xf]
        %v1703 = vld [vmem:[%s9 + $0x10] sm:$0xf]
        %v1704 = vld [vmem:[%s9 + $0x14] sm:$0xf]
        %v1705 = vld [vmem:[%s9 + $0x18] sm:$0xf]
        %v1706 = vld [vmem:[%s9 + $0x1c] sm:$0xf]
        %v1707 = vld [vmem:[%s10] sm:$0x1]
        %v1709 = vlaneseq
        %v1710 = vshrl.u32 %v1709, 7
        %v1711 = vsub.s32 0, %v1710
        %v1712 = vrot.slane %v1707, %v1711
        %v1722 = vunpack.c.l.b16 %v1699
        %v1723 = vunpack.c.l.b16 %v1700
        %v1724 = vunpack.c.l.b16 %v1701
        %v1725 = vunpack.c.l.b16 %v1702
        %v1726 = vunpack.c.l.b16 %v1703
        %v1727 = vunpack.c.l.b16 %v1704
        %v1728 = vunpack.c.l.b16 %v1705
        %v1729 = vunpack.c.l.b16 %v1706
        %v1730 = vpack.c.b16 %v1723, %v1722
        %v1731 = vpack.c.b16 %v1725, %v1724
        %v1732 = vpack.c.b16 %v1727, %v1726
        %v1733 = vpack.c.b16 %v1729, %v1728
        %vm1738 = vcmask 523264
        %v1740 = vsel %vm1738, %v1698, 0
        %1742 = vmatprep.subr.bf16.mxu0 0
        %1743 = vmatpush1.bf16.msra.mxu0 %v1730
        %1744 = vmatprep.subr.bf16.mxu0 0
        %1745 = vmatpush1.bf16.msra.mxu0 %v1731
        %1746 = vmatprep.subr.bf16.mxu0 0
        %1747 = vmatpush1.bf16.msra.mxu0 %v1732
        %1748 = vmatprep.subr.bf16.mxu0 0
        %1749 = vmatpush1.bf16.msra.mxu0 %v1733
        %1750 = vmatprep.subr.bf16.mxu0 0
        %1751 = vmatpush1.bf16.msra.mxu0 0
        %1752 = vmatprep.subr.bf16.mxu0 0
        %1753 = vmatpush1.bf16.msra.mxu0 0
        %1754 = vmatprep.subr.bf16.mxu0 0
        %1755 = vmatpush1.bf16.msra.mxu0 0
        %1756 = vmatprep.subr.bf16.mxu0 0
        %1757 = vmatpush1.bf16.msra.mxu0 0
        %1758 = vmatprep.subr.bf16.mxu0 0
        %1759 = vmatpush1.bf16.msra.mxu0 0
        %1760 = vmatprep.subr.bf16.mxu0 0
        %1761 = vmatpush1.bf16.msra.mxu0 0
        %1762 = vmatprep.subr.bf16.mxu0 0
        %1763 = vmatpush1.bf16.msra.mxu0 0
        %1764 = vmatprep.subr.bf16.mxu0 0
        %1765 = vmatpush1.bf16.msra.mxu0 0
        %1766 = vmatprep.subr.bf16.mxu0 0
        %1767 = vmatpush1.bf16.msra.mxu0 0
        %1768 = vmatprep.subr.bf16.mxu0 0
        %1769 = vmatpush1.bf16.msra.mxu0 0
        %1770 = vmatprep.subr.bf16.mxu0 0
        %1771 = vmatpush1.bf16.msra.mxu0 0
        %1772 = vmatprep.subr.bf16.mxu0 0
        %1773 = vmatpush1.bf16.msra.mxu0 0
        %1774 = vmatprep.mubr.bf16.mxu0 0
        %1775 = vmatmul.mubr.bf16.gmra.mrb[0].mxu0 %v1740
        %v1776 = vpop.f32.mrb[0].mxu0
        %v1777 = vadd.f32 %v1712, %v1776
        %v1778 = vpop.f32.mrb[0].mxu0
        %v1779 = vpop.f32.mrb[0].mxu0
        %v1780 = vpop.f32.mrb[0].mxu0
        %1781 = vdwg.mxu0
        %1782 = vst.msk [vmem:[%s433] sm:$0xff] %vm482, %v1777
        %s1783 = sand.u32 %s297, 1
        %s1784 = scalar_lea.sflag [#allocation4], %s1783
        %s1785 = sand.u32 %s297, 1
        %s1786 = smul.addr %s1785, 8
        %s1787 = scalar_lea.vmem [#allocation3], %s1786
        // Predicated region
        $region65: #{tpu_custom_call.1} parent=63 // pred_check
          %p1788 = pneg %p307
        $region66: #{tpu_custom_call.1} parent=63 // pred_check_branch
          %1790 = sbr.rel (%p1788) target = $region68
        $region67: #{tpu_custom_call.1} parent=63 // pred_region
          %s1792 = ssub.s32 128, 128
          %1793 = vsyncadd %s1784, %s1792
          %s1794 = sadd.s32 %s30, %s29
          %s1795 = smul.addr %s1794, 128
          %s1796 = scalar_lea.hbm %s11, %s1795
          %s1798 = sshll.u32 %s1787, 4
          %s1799 = int_to_ptr.vmem [resolvable:$true] %s1798
          %1801 = dma.vmem_to_hbm [thread:$0]  %s1799, 128, %s1796, %s1784
        $region68: #{tpu_custom_call.1} parent=63 // pred_fallthru
          _
      $region64: #{tpu_custom_call.1} parent=5 // pred_fallthru
        _
      %p1802 = scmp.le.s32.totalorder 2, %s20
      // Predicated region
      $region69: #{tpu_custom_call.1} parent=5 // pred_check
        %p1803 = pneg %p1802
      $region70: #{tpu_custom_call.1} parent=5 // pred_check_branch
        %1805 = sbr.rel (%p1803) target = $region72
      $region71: #{tpu_custom_call.1} parent=5 // pred_region
        %s1806 = ssub.s32 %s20, 2
        // Predicated region
        $region73: #{tpu_custom_call.1} parent=71 // pred_check
          %p1807 = pneg %p313
        $region74: #{tpu_custom_call.1} parent=71 // pred_check_branch
          %1809 = sbr.rel (%p1807) target = $region76
        $region75: #{tpu_custom_call.1} parent=71 // pred_region
          %s1810 = sand.u32 %s298, 1
          %s1811 = scalar_lea.sflag [#allocation4], %s1810
          %s1812 = sand.u32 %s298, 1
          %s1813 = smul.addr %s1812, 8
          %s1814 = scalar_lea.vmem [#allocation3], %s1813
          %1815 = dma.done %s1811, 128
        $region76: #{tpu_custom_call.1} parent=71 // pred_fallthru
          _
      $region72: #{tpu_custom_call.1} parent=5 // pred_fallthru
        _
    $region6: #{tpu_custom_call.1} parent=1 // loop_footer
      %s24 = sadd.s32 1, %s20
    $region7: #{tpu_custom_call.1} parent=1 // loop_footer_branch
      %19 = sbr.rel target = $region3
    $region8: #{tpu_custom_call.1} parent=1 // loop_exit
      _
    %1816 = vsyncpa [#allocation4], 1
    %s1817 = scalar_lea.sflag [#allocation4], 1
    %1818 = vsyncpa %s1817, 1

</llo_original>
